<compile_context>
chip_gen: v6e
topology: v6e:2x2x1
jax: 0.10.0
libtpu: 0.0.40
codegen_flags: <defaults>
</compile_context>

<pallas_src>
import functools
import math

import jax
import jax.numpy as jnp
from jax.experimental import pallas as pl
from jax.experimental.pallas import tpu as pltpu

F32 = jnp.float32
BF16 = jnp.bfloat16


def _round_up(n, m):
    return ((n + m - 1) // m) * m


def _bias_layout(t_dim, hidden, embed, xsf_pad, out_pad):
    """128-lane-aligned offsets of every bias / LN parameter in the f32 slab."""
    entries = [
        ('bt1', 2 * t_dim), ('bt2', t_dim),
        ('b1', hidden), ('b2', hidden),
        ('bxs', xsf_pad), ('bee', embed),
        ('bqkv', 3 * embed), ('bo', embed),
        ('gma', embed), ('bta', embed),
        ('bm1', hidden), ('bm2', out_pad),
    ]
    off, cur = {}, 0
    for name, width in entries:
        off[name] = (cur, width)
        cur += _round_up(width, 128)
    return off, cur


def _mish(x):
    # x * tanh(softplus(x)); stable softplus = max(x,0) + log1p(exp(-|x|))
    sp = jnp.maximum(x, 0.0) + jnp.log1p(jnp.exp(-jnp.abs(x)))
    return x * jnp.tanh(sp)


def _dot(a, w):
    # bf16 MXU matmul with f32 accumulation (weights already stored in bf16).
    return jnp.dot(a.astype(BF16), w.astype(BF16), preferred_element_type=F32)


def _diffusion_attention_kernel(
    act_ref,            # (B, xs_dim + t_dim) f32 : [x | state | sin_emb]
    bias_ref,           # (1, n_bias) f32 bias/LN slab
    wt1_ref, wt2_ref,   # time_mlp weights (bf16)
    wa_ref,             # (xs_dim + t_dim, hidden + xsf_pad + embed) bf16 fused early weight
    wb0_hbm,            # (embed,  4*embed)          bf16 : [wexs | wqkv]  (HBM)
    wb1_hbm,            # (embed,  embed + hidden)   bf16 : [wo   | w2  ]  (HBM)
    wb2_hbm,            # (hidden, hidden + out_pad) bf16 : [wm1  | wm2 ]  (HBM)
    out_ref,            # (B, out_pad) f32
    wb0, wb1, wb2,      # VMEM scratch, one per HBM slab
    sems,               # DMA semaphores (3,)
    *, xs_dim, t_dim, hidden, embed, xsf_pad, boff,
):
    # ---- kick off big-weight HBM->VMEM copies; they land while the early
    #      (small-weight) layers run.
    cp0 = pltpu.make_async_copy(wb0_hbm, wb0, sems.at[0])
    cp1 = pltpu.make_async_copy(wb1_hbm, wb1, sems.at[1])
    cp2 = pltpu.make_async_copy(wb2_hbm, wb2, sems.at[2])
    cp0.start()
    cp1.start()
    cp2.start()

    def bias(name):
        off, width = boff[name]
        return bias_ref[:, off:off + width]

    act = act_ref[...]
    xs = act[:, :xs_dim]                        # [x | state]
    sin = act[:, xs_dim:xs_dim + t_dim]         # sinusoidal time embedding

    # ---- time_mlp: Linear -> Mish -> Linear
    h = _mish(_dot(sin, wt1_ref[...]) + bias('bt1'))
    t = _dot(h, wt2_ref[...]) + bias('bt2')

    # ---- fused early matmul:
    #      [xs | t] @ [[w1xs, wxs, 0], [w1t, 0, wet]]
    #      -> [ex_layer hidden pre-act | extractor_x/state pre-act | t @ We_t]
    xt = jnp.concatenate([xs, t], axis=-1)
    big = _dot(xt, wa_ref[...])
    h1 = _mish(big[:, :hidden] + bias('b1'))                    # ex_layer L1
    xsf = _mish(big[:, hidden:hidden + xsf_pad] + bias('bxs'))  # [xf | sf | 0]
    t_we = big[:, hidden + xsf_pad:hidden + xsf_pad + embed]

    # ---- extractor: mish(xf@We_x + sf@We_s + t@We_t + be)   (needs slab 0)
    cp0.wait()
    extract = _mish(_dot(xsf, wb0[:, :embed]) + t_we + bias('bee'))

    # ---- single-head self-attention over the batch axis (torch 2-D semantics)
    qkv = _dot(extract, wb0[:, embed:]) + bias('bqkv')
    q = qkv[:, :embed]
    k = qkv[:, embed:2 * embed]
    v = qkv[:, 2 * embed:]
    scores = jax.lax.dot_general(q.astype(BF16), k.astype(BF16),
                                 (((1,), (1,)), ((), ())),
                                 preferred_element_type=F32)
    scores = scores * (1.0 / math.sqrt(embed))
    scores = scores - jnp.max(scores, axis=-1, keepdims=True)
    p = jnp.exp(scores)
    attn = p * pl.reciprocal(jnp.sum(p, axis=-1, keepdims=True), approx=True)
    att = jnp.dot(attn.astype(BF16), v.astype(BF16), preferred_element_type=F32)

    cp1.wait()
    att = _dot(att, wb1[:, :embed]) + bias('bo')     # attention out-projection

    # ---- AddNorm: LayerNorm(att + extract), eps = 1e-5  (all f32)
    y0 = att + extract
    mu = jnp.mean(y0, axis=-1, keepdims=True)
    var = jnp.mean((y0 - mu) ** 2, axis=-1, keepdims=True)
    y = (y0 - mu) * jax.lax.rsqrt(var + 1e-5) * bias('gma') + bias('bta')

    # ---- ex_layer L2 (deferred here so its weight DMA is always hidden)
    ex_y = _mish(_dot(h1, wb1[:, embed:]) + bias('b2'))
    y = y + ex_y

    # ---- mid_layer + tanh  (needs slab 2)
    cp2.wait()
    h2 = _mish(_dot(y, wb2[:, :hidden]) + bias('bm1'))
    out = jnp.tanh(_dot(h2, wb2[:, hidden:]) + bias('bm2'))
    out_ref[...] = out.astype(out_ref.dtype)


def init_params(key, action_dim, state_dim, *, t_dim=16, hidden=256, embed=256,
                s_dim=128, x_dim=64):
    """Deterministic synthetic parameters (torch-Linear-style uniform init).

    Returns (packed, raw): `packed` is the fused / padded / bf16 layout the
    kernel consumes; `raw` keeps the plain f32 matrices for the pure-JAX
    reference used in the self-test.
    """
    def lin(k, fan_in, fan_out):
        kw, kb = jax.random.split(k)
        s = 1.0 / math.sqrt(fan_in)
        w = jax.random.uniform(kw, (fan_in, fan_out), F32, -s, s)
        b = jax.random.uniform(kb, (fan_out,), F32, -s, s)
        return w, b

    xs_dim = action_dim + state_dim
    xsf_dim = x_dim + s_dim
    xsf_pad = _round_up(xsf_dim, 128)
    out_pad = _round_up(action_dim, 128)
    assert hidden == embed == xsf_pad, "packed big-weight slabs assume equal row counts"

    keys = jax.random.split(key, 13)
    raw = {}
    raw['wt1'], raw['bt1'] = lin(keys[0], t_dim, 2 * t_dim)
    raw['wt2'], raw['bt2'] = lin(keys[1], 2 * t_dim, t_dim)
    raw['w1'], raw['b1'] = lin(keys[2], action_dim + t_dim + state_dim, hidden)
    raw['w2'], raw['b2'] = lin(keys[3], hidden, hidden)
    raw['wxx'], raw['bxx'] = lin(keys[4], action_dim, x_dim)
    raw['wss'], raw['bss'] = lin(keys[5], state_dim, s_dim)
    raw['we'], raw['be'] = lin(keys[6], xsf_dim + t_dim, embed)
    raw['wq'], raw['bq'] = lin(keys[7], embed, embed)
    raw['wk'], raw['bk'] = lin(keys[8], embed, embed)
    raw['wv'], raw['bv'] = lin(keys[9], embed, embed)
    raw['wo'], raw['bo'] = lin(keys[10], embed, embed)
    raw['wm1'], raw['bm1'] = lin(keys[11], hidden, hidden)
    raw['wm2'], raw['bm2'] = lin(keys[12], hidden, action_dim)

    # --- fused early weight: [xs | t] -> [h1 pre-act | xsf pre-act | t @ We_t]
    #     torch ex_layer input order is [x, t, state]; regroup rows for [x|state].
    w1x = raw['w1'][:action_dim]
    w1t = raw['w1'][action_dim:action_dim + t_dim]
    w1s = raw['w1'][action_dim + t_dim:]
    #     torch extractor input order is [xf, t, sf]; split its rows.
    wex = raw['we'][:x_dim]
    wet = raw['we'][x_dim:x_dim + t_dim]
    wes = raw['we'][x_dim + t_dim:]

    wa = jnp.zeros((xs_dim + t_dim, hidden + xsf_pad + embed), F32)
    wa = wa.at[:action_dim, :hidden].set(w1x)
    wa = wa.at[action_dim:xs_dim, :hidden].set(w1s)
    wa = wa.at[xs_dim:, :hidden].set(w1t)
    wa = wa.at[:action_dim, hidden:hidden + x_dim].set(raw['wxx'])
    wa = wa.at[action_dim:xs_dim, hidden + x_dim:hidden + xsf_dim].set(raw['wss'])
    wa = wa.at[xs_dim:, hidden + xsf_pad:].set(wet)

    # --- extractor weight padded so xsf = [xf | sf | zeros] feeds it directly
    wexs = jnp.zeros((xsf_pad, embed), F32)
    wexs = wexs.at[:x_dim].set(wex)
    wexs = wexs.at[x_dim:xsf_dim].set(wes)

    wqkv = jnp.concatenate([raw['wq'], raw['wk'], raw['wv']], axis=1)
    wm2p = jnp.zeros((hidden, out_pad), F32).at[:, :action_dim].set(raw['wm2'])

    # --- big-weight slabs, grouped by first use inside the kernel
    wb0 = jnp.concatenate([wexs, wqkv], axis=1)             # (embed, 4*embed)
    wb1 = jnp.concatenate([raw['wo'], raw['w2']], axis=1)   # (embed, embed+hidden)
    wb2 = jnp.concatenate([raw['wm1'], wm2p], axis=1)       # (hidden, hidden+out_pad)

    # --- bias / LayerNorm slab (128-lane-aligned offsets)
    boff, n_bias = _bias_layout(t_dim, hidden, embed, xsf_pad, out_pad)
    vectors = {
        'bt1': raw['bt1'], 'bt2': raw['bt2'], 'b1': raw['b1'], 'b2': raw['b2'],
        'bxs': jnp.concatenate([raw['bxx'], raw['bss']]),
        'bee': raw['be'],
        'bqkv': jnp.concatenate([raw['bq'], raw['bk'], raw['bv']]),
        'bo': raw['bo'],
        'gma': jnp.ones((embed,), F32), 'bta': jnp.zeros((embed,), F32),
        'bm1': raw['bm1'], 'bm2': raw['bm2'],
    }
    bias = jnp.zeros((1, n_bias), F32)
    for name, vec in vectors.items():
        off, _ = boff[name]
        bias = bias.at[0, off:off + vec.shape[0]].set(vec)

    packed = {
        'wt1': raw['wt1'].astype(BF16), 'wt2': raw['wt2'].astype(BF16),
        'wa': wa.astype(BF16),
        'wb0': wb0.astype(BF16), 'wb1': wb1.astype(BF16), 'wb2': wb2.astype(BF16),
        'bias': bias,
    }
    return packed, raw


@functools.partial(jax.jit, static_argnames=('action_dim', 'state_dim', 't_dim',
                                             'hidden', 'embed', 's_dim', 'x_dim'))
def diffusion_attention_forward(params, x, time, state, *, action_dim, state_dim,
                                t_dim=16, hidden=256, embed=256, s_dim=128, x_dim=64):
    B = x.shape[0]
    x = x.astype(F32)
    state = state.reshape(B, -1).astype(F32)

    xs_dim = action_dim + state_dim
    xsf_pad = _round_up(x_dim + s_dim, 128)
    out_pad = _round_up(action_dim, 128)
    boff, _ = _bias_layout(t_dim, hidden, embed, xsf_pad, out_pad)

    # SinusoidalPosEmb (cheap elementwise glue, computed by XLA)
    half = t_dim // 2
    freqs = jnp.exp(jnp.arange(half, dtype=F32) * (-math.log(10000.0) / (half - 1)))
    args = time.astype(F32)[:, None] * freqs[None, :]
    sin_emb = jnp.concatenate([jnp.sin(args), jnp.cos(args)], axis=-1)

    # one activation operand: [x | state | sin_emb]
    act = jnp.concatenate([x, state, sin_emb], axis=1)

    kernel = functools.partial(
        _diffusion_attention_kernel,
        xs_dim=xs_dim, t_dim=t_dim, hidden=hidden, embed=embed,
        xsf_pad=xsf_pad, boff=boff)

    vmem = pl.BlockSpec(memory_space=pltpu.MemorySpace.VMEM)
    hbm = pl.BlockSpec(memory_space=pl.ANY)

    out = pl.pallas_call(
        kernel,
        out_shape=jax.ShapeDtypeStruct((B, out_pad), F32),
        in_specs=[vmem, vmem, vmem, vmem, vmem, hbm, hbm, hbm],
        out_specs=vmem,
        scratch_shapes=[
            pltpu.VMEM(params['wb0'].shape, BF16),
            pltpu.VMEM(params['wb1'].shape, BF16),
            pltpu.VMEM(params['wb2'].shape, BF16),
            pltpu.SemaphoreType.DMA((3,)),
        ],
    )(act, params['bias'], params['wt1'], params['wt2'], params['wa'],
      params['wb0'], params['wb1'], params['wb2'])
    return out[:, :action_dim]


def _reference_forward(raw, x, time, state, *, t_dim=16):
    """Pure-JAX f32 re-implementation of the torch module (eval mode)."""
    B = x.shape[0]
    x = x.astype(F32)
    state = state.reshape(B, -1).astype(F32)

    half = t_dim // 2
    freqs = jnp.exp(jnp.arange(half, dtype=F32) * (-math.log(10000.0) / (half - 1)))
    args = time.astype(F32)[:, None] * freqs[None, :]
    sin_emb = jnp.concatenate([jnp.sin(args), jnp.cos(args)], axis=-1)

    def mish(v):
        return v * jnp.tanh(jax.nn.softplus(v))

    t = mish(sin_emb @ raw['wt1'] + raw['bt1'])
    t = t @ raw['wt2'] + raw['bt2']

    ex_x = jnp.concatenate([x, t, state], axis=1)
    h1 = mish(ex_x @ raw['w1'] + raw['b1'])
    ex_y = mish(h1 @ raw['w2'] + raw['b2'])

    xf = mish(x @ raw['wxx'] + raw['bxx'])
    sf = mish(state @ raw['wss'] + raw['bss'])
    inp = jnp.concatenate([xf, t, sf], axis=1)
    extract = mish(inp @ raw['we'] + raw['be'])

    q = extract @ raw['wq'] + raw['bq']
    k = extract @ raw['wk'] + raw['bk']
    v = extract @ raw['wv'] + raw['bv']
    attn = jax.nn.softmax((q @ k.T) / math.sqrt(q.shape[-1]), axis=-1)
    att = (attn @ v) @ raw['wo'] + raw['bo']

    y0 = att + extract
    mu = jnp.mean(y0, axis=-1, keepdims=True)
    var = jnp.mean((y0 - mu) ** 2, axis=-1, keepdims=True)
    y = (y0 - mu) / jnp.sqrt(var + 1e-5)      # LayerNorm gamma=1, beta=0 at init

    y = y + ex_y
    h2 = mish(y @ raw['wm1'] + raw['bm1'])
    return jnp.tanh(h2 @ raw['wm2'] + raw['bm2'])


if __name__ == "__main__":
    key = jax.random.PRNGKey(0)
    k_param, k_x, k_t, k_s = jax.random.split(key, 4)

    B = 8
    action_dim = 4
    state_shape = (4, 4)                       # flattened state_dim = 16
    state_dim = int(math.prod(state_shape))

    params, raw = init_params(k_param, action_dim, state_dim)

    x = jax.random.normal(k_x, (B, action_dim), F32)
    time = jax.random.uniform(k_t, (B,), F32, 0.0, 1000.0)
    state = jax.random.normal(k_s, (B,) + state_shape, F32)

    out = diffusion_attention_forward(params, x, time, state,
                                      action_dim=action_dim, state_dim=state_dim)
    jax.block_until_ready(out)
    assert out.shape == (B, action_dim)
    assert bool(jnp.all(jnp.isfinite(out)))

    # self-test vs pure-JAX f32 reference (bf16 kernel weights -> loose tol)
    ref = _reference_forward(raw, x, time, state)
    err = float(jnp.max(jnp.abs(out - ref)))
    assert err < 0.1, f"kernel deviates from reference: max abs err = {err}"

    print("KERNEL_OK")
</pallas_src>

<mosaic_0001>
module attributes {stable_mosaic.version = 11 : i64} {
  func.func @_diffusion_attention_kernel(%arg0: memref<8x36xf32, #tpu.memory_space<vmem>>, %arg1: memref<1x3200xf32, #tpu.memory_space<vmem>>, %arg2: memref<16x32xbf16, #tpu.memory_space<vmem>>, %arg3: memref<32x16xbf16, #tpu.memory_space<vmem>>, %arg4: memref<36x768xbf16, #tpu.memory_space<vmem>>, %arg5: memref<256x1024xbf16, #tpu.memory_space<any>>, %arg6: memref<256x512xbf16, #tpu.memory_space<any>>, %arg7: memref<256x384xbf16, #tpu.memory_space<any>>, %arg8: memref<8x128xf32, #tpu.memory_space<vmem>>, %arg9: memref<256x1024xbf16, #tpu.memory_space<vmem>>, %arg10: memref<256x512xbf16, #tpu.memory_space<vmem>>, %arg11: memref<256x384xbf16, #tpu.memory_space<vmem>>, %arg12: memref<3x!tpu.dma_semaphore, #tpu.memory_space<semaphore_mem>>) attributes {dimension_semantics = [], scalar_prefetch = 0 : i64, scratch_operands = 4 : i64, tpu.core_type = #tpu.core_type<tc>} {
    %c0_i32 = arith.constant 0 : i32
    %0 = tpu.memref_slice %arg12[%c0_i32] : memref<3x!tpu.dma_semaphore, #tpu.memory_space<semaphore_mem>> -> memref<1x!tpu.dma_semaphore, #tpu.memory_space<semaphore_mem>>
    %1 = tpu.memref_squeeze %0 : memref<1x!tpu.dma_semaphore, #tpu.memory_space<semaphore_mem>> -> memref<!tpu.dma_semaphore, #tpu.memory_space<semaphore_mem>>
    tpu.enqueue_dma source(%arg5 : memref<256x1024xbf16, #tpu.memory_space<any>>) target(%arg9 : memref<256x1024xbf16, #tpu.memory_space<vmem>>) target_semaphore(%1 : memref<!tpu.dma_semaphore, #tpu.memory_space<semaphore_mem>>)
    %c1_i32 = arith.constant 1 : i32
    %2 = tpu.memref_slice %arg12[%c1_i32] : memref<3x!tpu.dma_semaphore, #tpu.memory_space<semaphore_mem>> -> memref<1x!tpu.dma_semaphore, #tpu.memory_space<semaphore_mem>>
    %3 = tpu.memref_squeeze %2 : memref<1x!tpu.dma_semaphore, #tpu.memory_space<semaphore_mem>> -> memref<!tpu.dma_semaphore, #tpu.memory_space<semaphore_mem>>
    tpu.enqueue_dma source(%arg6 : memref<256x512xbf16, #tpu.memory_space<any>>) target(%arg10 : memref<256x512xbf16, #tpu.memory_space<vmem>>) target_semaphore(%3 : memref<!tpu.dma_semaphore, #tpu.memory_space<semaphore_mem>>)
    %c2_i32 = arith.constant 2 : i32
    %4 = tpu.memref_slice %arg12[%c2_i32] : memref<3x!tpu.dma_semaphore, #tpu.memory_space<semaphore_mem>> -> memref<1x!tpu.dma_semaphore, #tpu.memory_space<semaphore_mem>>
    %5 = tpu.memref_squeeze %4 : memref<1x!tpu.dma_semaphore, #tpu.memory_space<semaphore_mem>> -> memref<!tpu.dma_semaphore, #tpu.memory_space<semaphore_mem>>
    tpu.enqueue_dma source(%arg7 : memref<256x384xbf16, #tpu.memory_space<any>>) target(%arg11 : memref<256x384xbf16, #tpu.memory_space<vmem>>) target_semaphore(%5 : memref<!tpu.dma_semaphore, #tpu.memory_space<semaphore_mem>>)
    %c0 = arith.constant 0 : index
    %c0_0 = arith.constant 0 : index
    %6 = vector.load %arg0[%c0, %c0_0] : memref<8x36xf32, #tpu.memory_space<vmem>>, vector<8x36xf32>
    %7 = vector.extract_strided_slice %6 {offsets = [0, 0], sizes = [8, 20], strides = [1, 1]} : vector<8x36xf32> to vector<8x20xf32>
    %8 = vector.extract_strided_slice %6 {offsets = [0, 20], sizes = [8, 16], strides = [1, 1]} : vector<8x36xf32> to vector<8x16xf32>
    %c0_1 = arith.constant 0 : index
    %c0_2 = arith.constant 0 : index
    %9 = vector.load %arg2[%c0_1, %c0_2] : memref<16x32xbf16, #tpu.memory_space<vmem>>, vector<16x32xbf16>
    %10 = arith.truncf %8 : vector<8x16xf32> to vector<8x16xbf16>
    %cst = arith.constant dense<0.000000e+00> : vector<8x32xf32>
    %11 = tpu.matmul %10, %9, %cst {dimension_numbers = #tpu.dot_dimension_numbers<[1], [0], [0], [1], [0, 0, 1, 1], [], []>} : vector<8x16xbf16>, vector<16x32xbf16>, vector<8x32xf32> -> vector<8x32xf32>
    %c0_3 = arith.constant 0 : index
    %c0_4 = arith.constant 0 : index
    %12 = vector.load %arg1[%c0_3, %c0_4] : memref<1x3200xf32, #tpu.memory_space<vmem>>, vector<1x32xf32>
    %13 = vector.broadcast %12 : vector<1x32xf32> to vector<8x32xf32>
    %14 = arith.addf %11, %13 : vector<8x32xf32>
    %cst_5 = arith.constant 0.000000e+00 : f32
    %15 = vector.broadcast %cst_5 : f32 to vector<8x32xf32>
    %16 = arith.maximumf %14, %15 : vector<8x32xf32>
    %17 = math.absf %14 : vector<8x32xf32>
    %cst_6 = arith.constant 0.000000e+00 : f32
    %18 = vector.broadcast %cst_6 : f32 to vector<8x32xf32>
    %19 = arith.subf %18, %17 : vector<8x32xf32>
    %20 = math.exp %19 : vector<8x32xf32>
    %21 = math.log1p %20 : vector<8x32xf32>
    %22 = arith.addf %16, %21 : vector<8x32xf32>
    %23 = math.tanh %22 : vector<8x32xf32>
    %24 = arith.mulf %14, %23 : vector<8x32xf32>
    %c0_7 = arith.constant 0 : index
    %c0_8 = arith.constant 0 : index
    %25 = vector.load %arg3[%c0_7, %c0_8] : memref<32x16xbf16, #tpu.memory_space<vmem>>, vector<32x16xbf16>
    %26 = arith.truncf %24 : vector<8x32xf32> to vector<8x32xbf16>
    %cst_9 = arith.constant dense<0.000000e+00> : vector<8x16xf32>
    %27 = tpu.matmul %26, %25, %cst_9 {dimension_numbers = #tpu.dot_dimension_numbers<[1], [0], [0], [1], [0, 0, 1, 1], [], []>} : vector<8x32xbf16>, vector<32x16xbf16>, vector<8x16xf32> -> vector<8x16xf32>
    %c0_10 = arith.constant 0 : index
    %c128 = arith.constant 128 : index
    %28 = vector.load %arg1[%c0_10, %c128] : memref<1x3200xf32, #tpu.memory_space<vmem>>, vector<1x16xf32>
    %29 = vector.broadcast %28 : vector<1x16xf32> to vector<8x16xf32>
    %30 = arith.addf %27, %29 : vector<8x16xf32>
    %31 = tpu.concatenate %7, %30 in 1 : vector<8x20xf32>, vector<8x16xf32> -> vector<8x36xf32>
    %c0_11 = arith.constant 0 : index
    %c0_12 = arith.constant 0 : index
    %32 = vector.load %arg4[%c0_11, %c0_12] : memref<36x768xbf16, #tpu.memory_space<vmem>>, vector<36x768xbf16>
    %33 = arith.truncf %31 : vector<8x36xf32> to vector<8x36xbf16>
    %cst_13 = arith.constant dense<0.000000e+00> : vector<8x768xf32>
    %34 = tpu.matmul %33, %32, %cst_13 {dimension_numbers = #tpu.dot_dimension_numbers<[1], [0], [0], [1], [0, 0, 1, 1], [], []>} : vector<8x36xbf16>, vector<36x768xbf16>, vector<8x768xf32> -> vector<8x768xf32>
    %35 = vector.extract_strided_slice %34 {offsets = [0, 0], sizes = [8, 256], strides = [1, 1]} : vector<8x768xf32> to vector<8x256xf32>
    %c0_14 = arith.constant 0 : index
    %c256 = arith.constant 256 : index
    %36 = vector.load %arg1[%c0_14, %c256] : memref<1x3200xf32, #tpu.memory_space<vmem>>, vector<1x256xf32>
    %37 = vector.broadcast %36 : vector<1x256xf32> to vector<8x256xf32>
    %38 = arith.addf %35, %37 : vector<8x256xf32>
    %cst_15 = arith.constant 0.000000e+00 : f32
    %39 = vector.broadcast %cst_15 : f32 to vector<8x256xf32>
    %40 = arith.maximumf %38, %39 : vector<8x256xf32>
    %41 = math.absf %38 : vector<8x256xf32>
    %cst_16 = arith.constant 0.000000e+00 : f32
    %42 = vector.broadcast %cst_16 : f32 to vector<8x256xf32>
    %43 = arith.subf %42, %41 : vector<8x256xf32>
    %44 = math.exp %43 : vector<8x256xf32>
    %45 = math.log1p %44 : vector<8x256xf32>
    %46 = arith.addf %40, %45 : vector<8x256xf32>
    %47 = math.tanh %46 : vector<8x256xf32>
    %48 = arith.mulf %38, %47 : vector<8x256xf32>
    %49 = vector.extract_strided_slice %34 {offsets = [0, 256], sizes = [8, 256], strides = [1, 1]} : vector<8x768xf32> to vector<8x256xf32>
    %c0_17 = arith.constant 0 : index
    %c768 = arith.constant 768 : index
    %50 = vector.load %arg1[%c0_17, %c768] : memref<1x3200xf32, #tpu.memory_space<vmem>>, vector<1x256xf32>
    %51 = vector.broadcast %50 : vector<1x256xf32> to vector<8x256xf32>
    %52 = arith.addf %49, %51 : vector<8x256xf32>
    %cst_18 = arith.constant 0.000000e+00 : f32
    %53 = vector.broadcast %cst_18 : f32 to vector<8x256xf32>
    %54 = arith.maximumf %52, %53 : vector<8x256xf32>
    %55 = math.absf %52 : vector<8x256xf32>
    %cst_19 = arith.constant 0.000000e+00 : f32
    %56 = vector.broadcast %cst_19 : f32 to vector<8x256xf32>
    %57 = arith.subf %56, %55 : vector<8x256xf32>
    %58 = math.exp %57 : vector<8x256xf32>
    %59 = math.log1p %58 : vector<8x256xf32>
    %60 = arith.addf %54, %59 : vector<8x256xf32>
    %61 = math.tanh %60 : vector<8x256xf32>
    %62 = arith.mulf %52, %61 : vector<8x256xf32>
    %63 = vector.extract_strided_slice %34 {offsets = [0, 512], sizes = [8, 256], strides = [1, 1]} : vector<8x768xf32> to vector<8x256xf32>
    %c0_i32_20 = arith.constant 0 : i32
    %64 = tpu.memref_slice %arg12[%c0_i32_20] : memref<3x!tpu.dma_semaphore, #tpu.memory_space<semaphore_mem>> -> memref<1x!tpu.dma_semaphore, #tpu.memory_space<semaphore_mem>>
    %65 = tpu.memref_squeeze %64 : memref<1x!tpu.dma_semaphore, #tpu.memory_space<semaphore_mem>> -> memref<!tpu.dma_semaphore, #tpu.memory_space<semaphore_mem>>
    tpu.wait_dma2 semaphore(%65 : memref<!tpu.dma_semaphore, #tpu.memory_space<semaphore_mem>>) src(%arg5 : memref<256x1024xbf16, #tpu.memory_space<any>>) dst(%arg9 : memref<256x1024xbf16, #tpu.memory_space<vmem>>)
    %c0_21 = arith.constant 0 : index
    %c0_22 = arith.constant 0 : index
    %66 = vector.load %arg9[%c0_21, %c0_22] : memref<256x1024xbf16, #tpu.memory_space<vmem>>, vector<256x256xbf16>
    %67 = arith.truncf %62 : vector<8x256xf32> to vector<8x256xbf16>
    %cst_23 = arith.constant dense<0.000000e+00> : vector<8x256xf32>
    %68 = tpu.matmul %67, %66, %cst_23 {dimension_numbers = #tpu.dot_dimension_numbers<[1], [0], [0], [1], [0, 0, 1, 1], [], []>} : vector<8x256xbf16>, vector<256x256xbf16>, vector<8x256xf32> -> vector<8x256xf32>
    %69 = arith.addf %68, %63 : vector<8x256xf32>
    %c0_24 = arith.constant 0 : index
    %c1024 = arith.constant 1024 : index
    %70 = vector.load %arg1[%c0_24, %c1024] : memref<1x3200xf32, #tpu.memory_space<vmem>>, vector<1x256xf32>
    %71 = vector.broadcast %70 : vector<1x256xf32> to vector<8x256xf32>
    %72 = arith.addf %69, %71 : vector<8x256xf32>
    %cst_25 = arith.constant 0.000000e+00 : f32
    %73 = vector.broadcast %cst_25 : f32 to vector<8x256xf32>
    %74 = arith.maximumf %72, %73 : vector<8x256xf32>
    %75 = math.absf %72 : vector<8x256xf32>
    %cst_26 = arith.constant 0.000000e+00 : f32
    %76 = vector.broadcast %cst_26 : f32 to vector<8x256xf32>
    %77 = arith.subf %76, %75 : vector<8x256xf32>
    %78 = math.exp %77 : vector<8x256xf32>
    %79 = math.log1p %78 : vector<8x256xf32>
    %80 = arith.addf %74, %79 : vector<8x256xf32>
    %81 = math.tanh %80 : vector<8x256xf32>
    %82 = arith.mulf %72, %81 : vector<8x256xf32>
    %c0_27 = arith.constant 0 : index
    %c256_28 = arith.constant 256 : index
    %83 = vector.load %arg9[%c0_27, %c256_28] : memref<256x1024xbf16, #tpu.memory_space<vmem>>, vector<256x768xbf16>
    %84 = arith.truncf %82 : vector<8x256xf32> to vector<8x256xbf16>
    %cst_29 = arith.constant dense<0.000000e+00> : vector<8x768xf32>
    %85 = tpu.matmul %84, %83, %cst_29 {dimension_numbers = #tpu.dot_dimension_numbers<[1], [0], [0], [1], [0, 0, 1, 1], [], []>} : vector<8x256xbf16>, vector<256x768xbf16>, vector<8x768xf32> -> vector<8x768xf32>
    %c0_30 = arith.constant 0 : index
    %c1280 = arith.constant 1280 : index
    %86 = vector.load %arg1[%c0_30, %c1280] : memref<1x3200xf32, #tpu.memory_space<vmem>>, vector<1x768xf32>
    %87 = vector.broadcast %86 : vector<1x768xf32> to vector<8x768xf32>
    %88 = arith.addf %85, %87 : vector<8x768xf32>
    %89 = vector.extract_strided_slice %88 {offsets = [0, 0], sizes = [8, 256], strides = [1, 1]} : vector<8x768xf32> to vector<8x256xf32>
    %90 = vector.extract_strided_slice %88 {offsets = [0, 256], sizes = [8, 256], strides = [1, 1]} : vector<8x768xf32> to vector<8x256xf32>
    %91 = vector.extract_strided_slice %88 {offsets = [0, 512], sizes = [8, 256], strides = [1, 1]} : vector<8x768xf32> to vector<8x256xf32>
    %92 = arith.truncf %89 : vector<8x256xf32> to vector<8x256xbf16>
    %93 = arith.truncf %90 : vector<8x256xf32> to vector<8x256xbf16>
    %cst_31 = arith.constant dense<0.000000e+00> : vector<8x8xf32>
    %94 = tpu.matmul %92, %93, %cst_31 {dimension_numbers = #tpu.dot_dimension_numbers<[1], [1], [0], [0], [0, 0, 1, 0], [], []>} : vector<8x256xbf16>, vector<8x256xbf16>, vector<8x8xf32> -> vector<8x8xf32>
    %cst_32 = arith.constant 6.250000e-02 : f32
    %95 = vector.broadcast %cst_32 : f32 to vector<8x8xf32>
    %96 = arith.mulf %94, %95 : vector<8x8xf32>
    %cst_33 = arith.constant dense<0xFF800000> : vector<8xf32>
    %97 = vector.multi_reduction <maximumf>, %96, %cst_33 [1] : vector<8x8xf32> to vector<8xf32>
    %98 = vector.shape_cast %97 : vector<8xf32> to vector<8x1xf32>
    %99 = vector.broadcast %98 : vector<8x1xf32> to vector<8x8xf32>
    %100 = arith.subf %96, %99 : vector<8x8xf32>
    %101 = math.exp %100 : vector<8x8xf32>
    %cst_34 = arith.constant dense<0.000000e+00> : vector<8xf32>
    %102 = vector.multi_reduction <add>, %101, %cst_34 [1] : vector<8x8xf32> to vector<8xf32>
    %103 = vector.shape_cast %102 : vector<8xf32> to vector<8x1xf32>
    %104 = tpu.reciprocal %103 {approx = true} : vector<8x1xf32> -> vector<8x1xf32>
    %105 = vector.broadcast %104 : vector<8x1xf32> to vector<8x8xf32>
    %106 = arith.mulf %101, %105 : vector<8x8xf32>
    %107 = arith.truncf %106 : vector<8x8xf32> to vector<8x8xbf16>
    %108 = arith.truncf %91 : vector<8x256xf32> to vector<8x256xbf16>
    %cst_35 = arith.constant dense<0.000000e+00> : vector<8x256xf32>
    %109 = tpu.matmul %107, %108, %cst_35 {dimension_numbers = #tpu.dot_dimension_numbers<[1], [0], [0], [1], [0, 0, 1, 1], [], []>} : vector<8x8xbf16>, vector<8x256xbf16>, vector<8x256xf32> -> vector<8x256xf32>
    %c1_i32_36 = arith.constant 1 : i32
    %110 = tpu.memref_slice %arg12[%c1_i32_36] : memref<3x!tpu.dma_semaphore, #tpu.memory_space<semaphore_mem>> -> memref<1x!tpu.dma_semaphore, #tpu.memory_space<semaphore_mem>>
    %111 = tpu.memref_squeeze %110 : memref<1x!tpu.dma_semaphore, #tpu.memory_space<semaphore_mem>> -> memref<!tpu.dma_semaphore, #tpu.memory_space<semaphore_mem>>
    tpu.wait_dma2 semaphore(%111 : memref<!tpu.dma_semaphore, #tpu.memory_space<semaphore_mem>>) src(%arg6 : memref<256x512xbf16, #tpu.memory_space<any>>) dst(%arg10 : memref<256x512xbf16, #tpu.memory_space<vmem>>)
    %c0_37 = arith.constant 0 : index
    %c0_38 = arith.constant 0 : index
    %112 = vector.load %arg10[%c0_37, %c0_38] : memref<256x512xbf16, #tpu.memory_space<vmem>>, vector<256x256xbf16>
    %113 = arith.truncf %109 : vector<8x256xf32> to vector<8x256xbf16>
    %cst_39 = arith.constant dense<0.000000e+00> : vector<8x256xf32>
    %114 = tpu.matmul %113, %112, %cst_39 {dimension_numbers = #tpu.dot_dimension_numbers<[1], [0], [0], [1], [0, 0, 1, 1], [], []>} : vector<8x256xbf16>, vector<256x256xbf16>, vector<8x256xf32> -> vector<8x256xf32>
    %c0_40 = arith.constant 0 : index
    %c2048 = arith.constant 2048 : index
    %115 = vector.load %arg1[%c0_40, %c2048] : memref<1x3200xf32, #tpu.memory_space<vmem>>, vector<1x256xf32>
    %116 = vector.broadcast %115 : vector<1x256xf32> to vector<8x256xf32>
    %117 = arith.addf %114, %116 : vector<8x256xf32>
    %118 = arith.addf %117, %82 : vector<8x256xf32>
    %cst_41 = arith.constant dense<0.000000e+00> : vector<8xf32>
    %119 = vector.multi_reduction <add>, %118, %cst_41 [1] : vector<8x256xf32> to vector<8xf32>
    %120 = vector.shape_cast %119 : vector<8xf32> to vector<8x1xf32>
    %cst_42 = arith.constant 2.560000e+02 : f32
    %121 = vector.broadcast %cst_42 : f32 to vector<8x1xf32>
    %122 = arith.divf %120, %121 : vector<8x1xf32>
    %123 = vector.broadcast %122 : vector<8x1xf32> to vector<8x256xf32>
    %124 = arith.subf %118, %123 : vector<8x256xf32>
    %125 = arith.mulf %124, %124 : vector<8x256xf32>
    %cst_43 = arith.constant dense<0.000000e+00> : vector<8xf32>
    %126 = vector.multi_reduction <add>, %125, %cst_43 [1] : vector<8x256xf32> to vector<8xf32>
    %127 = vector.shape_cast %126 : vector<8xf32> to vector<8x1xf32>
    %cst_44 = arith.constant 2.560000e+02 : f32
    %128 = vector.broadcast %cst_44 : f32 to vector<8x1xf32>
    %129 = arith.divf %127, %128 : vector<8x1xf32>
    %130 = vector.broadcast %122 : vector<8x1xf32> to vector<8x256xf32>
    %131 = arith.subf %118, %130 : vector<8x256xf32>
    %cst_45 = arith.constant 9.99999974E-6 : f32
    %132 = vector.broadcast %cst_45 : f32 to vector<8x1xf32>
    %133 = arith.addf %129, %132 : vector<8x1xf32>
    %134 = math.rsqrt %133 : vector<8x1xf32>
    %135 = vector.broadcast %134 : vector<8x1xf32> to vector<8x256xf32>
    %136 = arith.mulf %131, %135 : vector<8x256xf32>
    %c0_46 = arith.constant 0 : index
    %c2304 = arith.constant 2304 : index
    %137 = vector.load %arg1[%c0_46, %c2304] : memref<1x3200xf32, #tpu.memory_space<vmem>>, vector<1x256xf32>
    %138 = vector.broadcast %137 : vector<1x256xf32> to vector<8x256xf32>
    %139 = arith.mulf %136, %138 : vector<8x256xf32>
    %c0_47 = arith.constant 0 : index
    %c2560 = arith.constant 2560 : index
    %140 = vector.load %arg1[%c0_47, %c2560] : memref<1x3200xf32, #tpu.memory_space<vmem>>, vector<1x256xf32>
    %141 = vector.broadcast %140 : vector<1x256xf32> to vector<8x256xf32>
    %142 = arith.addf %139, %141 : vector<8x256xf32>
    %c0_48 = arith.constant 0 : index
    %c256_49 = arith.constant 256 : index
    %143 = vector.load %arg10[%c0_48, %c256_49] : memref<256x512xbf16, #tpu.memory_space<vmem>>, vector<256x256xbf16>
    %144 = arith.truncf %48 : vector<8x256xf32> to vector<8x256xbf16>
    %cst_50 = arith.constant dense<0.000000e+00> : vector<8x256xf32>
    %145 = tpu.matmul %144, %143, %cst_50 {dimension_numbers = #tpu.dot_dimension_numbers<[1], [0], [0], [1], [0, 0, 1, 1], [], []>} : vector<8x256xbf16>, vector<256x256xbf16>, vector<8x256xf32> -> vector<8x256xf32>
    %c0_51 = arith.constant 0 : index
    %c512 = arith.constant 512 : index
    %146 = vector.load %arg1[%c0_51, %c512] : memref<1x3200xf32, #tpu.memory_space<vmem>>, vector<1x256xf32>
    %147 = vector.broadcast %146 : vector<1x256xf32> to vector<8x256xf32>
    %148 = arith.addf %145, %147 : vector<8x256xf32>
    %cst_52 = arith.constant 0.000000e+00 : f32
    %149 = vector.broadcast %cst_52 : f32 to vector<8x256xf32>
    %150 = arith.maximumf %148, %149 : vector<8x256xf32>
    %151 = math.absf %148 : vector<8x256xf32>
    %cst_53 = arith.constant 0.000000e+00 : f32
    %152 = vector.broadcast %cst_53 : f32 to vector<8x256xf32>
    %153 = arith.subf %152, %151 : vector<8x256xf32>
    %154 = math.exp %153 : vector<8x256xf32>
    %155 = math.log1p %154 : vector<8x256xf32>
    %156 = arith.addf %150, %155 : vector<8x256xf32>
    %157 = math.tanh %156 : vector<8x256xf32>
    %158 = arith.mulf %148, %157 : vector<8x256xf32>
    %159 = arith.addf %142, %158 : vector<8x256xf32>
    %c2_i32_54 = arith.constant 2 : i32
    %160 = tpu.memref_slice %arg12[%c2_i32_54] : memref<3x!tpu.dma_semaphore, #tpu.memory_space<semaphore_mem>> -> memref<1x!tpu.dma_semaphore, #tpu.memory_space<semaphore_mem>>
    %161 = tpu.memref_squeeze %160 : memref<1x!tpu.dma_semaphore, #tpu.memory_space<semaphore_mem>> -> memref<!tpu.dma_semaphore, #tpu.memory_space<semaphore_mem>>
    tpu.wait_dma2 semaphore(%161 : memref<!tpu.dma_semaphore, #tpu.memory_space<semaphore_mem>>) src(%arg7 : memref<256x384xbf16, #tpu.memory_space<any>>) dst(%arg11 : memref<256x384xbf16, #tpu.memory_space<vmem>>)
    %c0_55 = arith.constant 0 : index
    %c0_56 = arith.constant 0 : index
    %162 = vector.load %arg11[%c0_55, %c0_56] : memref<256x384xbf16, #tpu.memory_space<vmem>>, vector<256x256xbf16>
    %163 = arith.truncf %159 : vector<8x256xf32> to vector<8x256xbf16>
    %cst_57 = arith.constant dense<0.000000e+00> : vector<8x256xf32>
    %164 = tpu.matmul %163, %162, %cst_57 {dimension_numbers = #tpu.dot_dimension_numbers<[1], [0], [0], [1], [0, 0, 1, 1], [], []>} : vector<8x256xbf16>, vector<256x256xbf16>, vector<8x256xf32> -> vector<8x256xf32>
    %c0_58 = arith.constant 0 : index
    %c2816 = arith.constant 2816 : index
    %165 = vector.load %arg1[%c0_58, %c2816] : memref<1x3200xf32, #tpu.memory_space<vmem>>, vector<1x256xf32>
    %166 = vector.broadcast %165 : vector<1x256xf32> to vector<8x256xf32>
    %167 = arith.addf %164, %166 : vector<8x256xf32>
    %cst_59 = arith.constant 0.000000e+00 : f32
    %168 = vector.broadcast %cst_59 : f32 to vector<8x256xf32>
    %169 = arith.maximumf %167, %168 : vector<8x256xf32>
    %170 = math.absf %167 : vector<8x256xf32>
    %cst_60 = arith.constant 0.000000e+00 : f32
    %171 = vector.broadcast %cst_60 : f32 to vector<8x256xf32>
    %172 = arith.subf %171, %170 : vector<8x256xf32>
    %173 = math.exp %172 : vector<8x256xf32>
    %174 = math.log1p %173 : vector<8x256xf32>
    %175 = arith.addf %169, %174 : vector<8x256xf32>
    %176 = math.tanh %175 : vector<8x256xf32>
    %177 = arith.mulf %167, %176 : vector<8x256xf32>
    %c0_61 = arith.constant 0 : index
    %c256_62 = arith.constant 256 : index
    %178 = vector.load %arg11[%c0_61, %c256_62] : memref<256x384xbf16, #tpu.memory_space<vmem>>, vector<256x128xbf16>
    %179 = arith.truncf %177 : vector<8x256xf32> to vector<8x256xbf16>
    %cst_63 = arith.constant dense<0.000000e+00> : vector<8x128xf32>
    %180 = tpu.matmul %179, %178, %cst_63 {dimension_numbers = #tpu.dot_dimension_numbers<[1], [0], [0], [1], [0, 0, 1, 1], [], []>} : vector<8x256xbf16>, vector<256x128xbf16>, vector<8x128xf32> -> vector<8x128xf32>
    %c0_64 = arith.constant 0 : index
    %c3072 = arith.constant 3072 : index
    %181 = vector.load %arg1[%c0_64, %c3072] : memref<1x3200xf32, #tpu.memory_space<vmem>>, vector<1x128xf32>
    %182 = vector.broadcast %181 : vector<1x128xf32> to vector<8x128xf32>
    %183 = arith.addf %180, %182 : vector<8x128xf32>
    %184 = math.tanh %183 : vector<8x128xf32>
    %c0_65 = arith.constant 0 : index
    %c0_66 = arith.constant 0 : index
    %185 = vector.load %arg8[%c0_65, %c0_66] : memref<8x128xf32, #tpu.memory_space<vmem>>, vector<8x128xf32>
    tpu.vector_store %arg8[%c0_65, %c0_66], %184 {strides = array<i32>} : memref<8x128xf32, #tpu.memory_space<vmem>>, vector<8x128xf32>,
    return
  }
}

</mosaic_0001>

<llo_original>
// kernel: diffusion_attention_forward.1
$region0: #{diffusion_attention_forward.1}
  #allocation0 [shape = 'u32[]', space=smem, size = 0x4, offset = 0x4, fixed_abs, tag = 'smem constant byte address 0x4 - core index']
  #allocation1 [shape = 'u32[144,128]{1,0:T(1,128)}', space=vmem, size = 0x12000, scoped, tag = 'internal scratch']
  #allocation2 [shape = 'bf16[256,1024]{1,0:T(8,128)(2,1)}', space=vmem, size = 0x80000, scoped, tag = 'scratch operand']
  #allocation3 [shape = 'bf16[256,512]{1,0:T(8,128)(2,1)}', space=vmem, size = 0x40000, scoped, tag = 'scratch operand']
  #allocation4 [shape = 'bf16[256,384]{1,0:T(8,128)(2,1)}', space=vmem, size = 0x30000, scoped, tag = 'scratch operand']
  #allocation5 [shape = 's32[3]{0}', space=sflag, size = 0xc, scoped, tag = 'scratch operand']
  #allocation10 [shape = 's32[]', space=sflag, size = 0x4, offset = 0, fixed_abs, tag = 'sflag constant byte address 0x0 - dummy sync flag']
  #allocation11 [shape = 's32[]', space=sflag, size = 0x4, offset = 0, fixed_abs, tag = 'sflag constant byte address 0x0 - dummy sync flag']
  #allocation12 [shape = 'u32[]', space=smem, size = 0x4, offset = 0x44, fixed_abs, tag = 'smem constant byte address 0x44 - assertion arg 0']
  #allocation13 [shape = 'u32[]', space=smem, size = 0x4, offset = 0x48, fixed_abs, tag = 'smem constant byte address 0x48 - assertion arg 1']
  #allocation14 [shape = 's32[]', space=sflag, size = 0x4, offset = 0, fixed_abs, tag = 'sflag constant byte address 0x0 - dummy sync flag']
  #allocation15 [shape = 's32[]', space=sflag, size = 0x4, offset = 0, fixed_abs, tag = 'sflag constant byte address 0x0 - dummy sync flag']
  #allocation16 [shape = 's32[]', space=sflag, size = 0x4, offset = 0, fixed_abs, tag = 'sflag constant byte address 0x0 - dummy sync flag']
  #allocation17 [shape = 's32[]', space=sflag, size = 0x4, offset = 0, fixed_abs, tag = 'sflag constant byte address 0x0 - dummy sync flag']
  %s0 = inlined_call_operand.vmem [shape: f32[8,36], index: 0, kind: input, shape index: {}]
  %s1 = inlined_call_operand.hbm [shape: f32[1,3200], index: 1, kind: input, shape index: {}]
  %s2 = inlined_call_operand.hbm [shape: bf16[16,32], index: 2, kind: input, shape index: {}]
  %s3 = inlined_call_operand.vmem [shape: bf16[32,16], index: 3, kind: input, shape index: {}]
  %s4 = inlined_call_operand.vmem [shape: bf16[36,768], index: 4, kind: input, shape index: {}]
  %s5 = inlined_call_operand.hbm [shape: bf16[256,1024], index: 5, kind: input, shape index: {}]
  %s6 = inlined_call_operand.hbm [shape: bf16[256,512], index: 6, kind: input, shape index: {}]
  %s7 = inlined_call_operand.hbm [shape: bf16[256,384], index: 7, kind: input, shape index: {}]
  %s8 = inlined_call_operand.vmem [shape: f32[8,128], index: 8, kind: output, shape index: {}]
  %s9 = sld [smem:[#allocation0]]
  $region50: #{diffusion_attention_forward.1} parent=0
    _
  %s11 = ssub.s32 1, %s9
  %s12 = scalar_select 0, %s11, %s9
  $region1: #{diffusion_attention_forward.1} parent=0
    #allocation6 [shape = 'u8[12800]{0}', space=vmem, size = 0x3400, scoped, tag = 'input window, operand 1, single buffered']
    #allocation7 [shape = 's32[1]{0}', space=sflag, size = 0x4, scoped, tag = 'scoped memory for diffusion_attention_forward.1']
    #allocation8 [shape = 'u8[4096]{0}', space=vmem, size = 0x1000, scoped, tag = 'input window, operand 2, single buffered']
    #allocation9 [shape = 's32[1]{0}', space=sflag, size = 0x4, scoped, tag = 'scoped memory for diffusion_attention_forward.1']
    %13 = vsyncpa [#allocation7], 0
    %14 = vsyncpa [#allocation9], 0
    // Predicated region
    $region2: #{diffusion_attention_forward.1} parent=1 // pred_check
      _
    $region3: #{diffusion_attention_forward.1} parent=1 // pred_check_branch
      %16 = sbr.rel (0) target = $region5
    $region4: #{diffusion_attention_forward.1} parent=1 // pred_region
      _
    $region5: #{diffusion_attention_forward.1} parent=1 // pred_fallthru
      _
    // Predicated region
    $region6: #{diffusion_attention_forward.1} parent=1 // pred_check
      _
    $region7: #{diffusion_attention_forward.1} parent=1 // pred_check_branch
      %18 = sbr.rel (0) target = $region9
    $region8: #{diffusion_attention_forward.1} parent=1 // pred_region
      %s20 = ssub.s32 400, 400
      %21 = vsyncadd [#allocation7], %s20
      %s23 = sshll.u32 [#allocation6], 4
      %s24 = int_to_ptr.vmem [resolvable:$true] %s23
      %26 = dma.hbm_to_vmem [thread:$0]  %s1, 400, %s24, [#allocation7]
    $region9: #{diffusion_attention_forward.1} parent=1 // pred_fallthru
      _
    // Predicated region
    $region10: #{diffusion_attention_forward.1} parent=1 // pred_check
      _
    $region11: #{diffusion_attention_forward.1} parent=1 // pred_check_branch
      %28 = sbr.rel (0) target = $region13
    $region12: #{diffusion_attention_forward.1} parent=1 // pred_region
      %s30 = ssub.s32 128, 128
      %31 = vsyncadd [#allocation9], %s30
      %s32 = sshll.u32 [#allocation8], 4
      %s33 = int_to_ptr.vmem [resolvable:$true] %s32
      %38 = dma.hbm_to_vmem [thread:$0]  %s2, 128, %s33, [#allocation9], 64, 64, 4
    $region13: #{diffusion_attention_forward.1} parent=1 // pred_fallthru
      _
    // Predicated region
    $region14: #{diffusion_attention_forward.1} parent=1 // pred_check
      _
    $region15: #{diffusion_attention_forward.1} parent=1 // pred_check_branch
      %40 = sbr.rel (0) target = $region17
    $region16: #{diffusion_attention_forward.1} parent=1 // pred_region
      _
    $region17: #{diffusion_attention_forward.1} parent=1 // pred_fallthru
      _
    // Predicated region
    $region18: #{diffusion_attention_forward.1} parent=1 // pred_check
      _
    $region19: #{diffusion_attention_forward.1} parent=1 // pred_check_branch
      %42 = sbr.rel (0) target = $region21
    $region20: #{diffusion_attention_forward.1} parent=1 // pred_region
      _
    $region21: #{diffusion_attention_forward.1} parent=1 // pred_fallthru
      _
    // Predicated region
    $region22: #{diffusion_attention_forward.1} parent=1 // pred_check
      _
    $region23: #{diffusion_attention_forward.1} parent=1 // pred_check_branch
      %44 = sbr.rel (0) target = $region25
    $region24: #{diffusion_attention_forward.1} parent=1 // pred_region
      %45 = dma.done [#allocation7], 400
    $region25: #{diffusion_attention_forward.1} parent=1 // pred_fallthru
      _
    // Predicated region
    $region26: #{diffusion_attention_forward.1} parent=1 // pred_check
      _
    $region27: #{diffusion_attention_forward.1} parent=1 // pred_check_branch
      %47 = sbr.rel (0) target = $region29
    $region28: #{diffusion_attention_forward.1} parent=1 // pred_region
      %48 = dma.done [#allocation9], 128
    $region29: #{diffusion_attention_forward.1} parent=1 // pred_fallthru
      _
    // Predicated region
    $region30: #{diffusion_attention_forward.1} parent=1 // pred_check
      _
    $region31: #{diffusion_attention_forward.1} parent=1 // pred_check_branch
      %51 = sbr.rel target = $region33
    $region32: #{diffusion_attention_forward.1} parent=1 // pred_region
      %52 = sst [smem:[#allocation12]] [#allocation11]
      %53 = sst [smem:[#allocation13]] [#allocation10]
    $region33: #{diffusion_attention_forward.1} parent=1 // pred_fallthru
      _
    %55 = shalt.err (0)
    %s57 = sshll.u32 [#allocation2], 4
    %s58 = int_to_ptr.vmem [resolvable:$true] %s57
    %60 = dma.hbm_to_vmem [thread:$0]  %s5, 16384, %s58, [#allocation5]
    %s61 = scalar_lea.sflag [#allocation5], 1
    // Predicated region
    $region34: #{diffusion_attention_forward.1} parent=1 // pred_check
      _
    $region35: #{diffusion_attention_forward.1} parent=1 // pred_check_branch
      %63 = sbr.rel target = $region37
    $region36: #{diffusion_attention_forward.1} parent=1 // pred_region
      %64 = sst [smem:[#allocation12]] [#allocation15]
      %65 = sst [smem:[#allocation13]] [#allocation14]
    $region37: #{diffusion_attention_forward.1} parent=1 // pred_fallthru
      _
    %67 = shalt.err (0)
    %s69 = sshll.u32 [#allocation3], 4
    %s70 = int_to_ptr.vmem [resolvable:$true] %s69
    %72 = dma.hbm_to_vmem [thread:$0]  %s6, 8192, %s70, %s61
    %s73 = scalar_lea.sflag [#allocation5], 2
    // Predicated region
    $region38: #{diffusion_attention_forward.1} parent=1 // pred_check
      _
    $region39: #{diffusion_attention_forward.1} parent=1 // pred_check_branch
      %75 = sbr.rel target = $region41
    $region40: #{diffusion_attention_forward.1} parent=1 // pred_region
      %76 = sst [smem:[#allocation12]] [#allocation17]
      %77 = sst [smem:[#allocation13]] [#allocation16]
    $region41: #{diffusion_attention_forward.1} parent=1 // pred_fallthru
      _
    %79 = shalt.err (0)
    %s81 = sshll.u32 [#allocation4], 4
    %s82 = int_to_ptr.vmem [resolvable:$true] %s81
    %84 = dma.hbm_to_vmem [thread:$0]  %s7, 6144, %s82, %s73
    %v85 = vld [vmem:[%s0] sm:$0xff]
    %v86 = vld [vmem:[#allocation8] sm:$0xf]
    %v87 = vld [vmem:[#allocation8 + $0x4] sm:$0xf]
    %v88 = vpack.c.bf16 %v85, %v85
    %v89 = vld [vmem:[#allocation6] sm:$0x1]
    %v91 = vlaneseq
    %v92 = vshrl.u32 %v91, 7
    %v93 = vsub.s32 0, %v92
    %v94 = vrot.slane %v89, %v93
    %97 = vrot.lane.b32.xlu0 %v88, 108
    %v98 = vpop.permute.xlu0 %97
    %v101 = vunpack.c.l.b16 %v86
    %v102 = vunpack.c.l.b16 %v87
    %v103 = vpack.c.b16 %v102, %v101
    %vm105 = vcmask 130048
    %v107 = vsel %vm105, %v98, 0
    %109 = vmatprep.subr.bf16.mxu0 0
    %110 = vmatpush1.bf16.msra.mxu0 0
    %111 = vmatprep.subr.bf16.mxu0 0
    %112 = vmatpush1.bf16.msra.mxu0 0
    %113 = vmatprep.subr.bf16.mxu0 0
    %114 = vmatpush1.bf16.msra.mxu0 0
    %115 = vmatprep.subr.bf16.mxu0 0
    %116 = vmatpush1.bf16.msra.mxu0 0
    %117 = vmatprep.subr.bf16.mxu0 0
    %118 = vmatpush1.bf16.msra.mxu0 0
    %119 = vmatprep.subr.bf16.mxu0 0
    %120 = vmatpush1.bf16.msra.mxu0 0
    %121 = vmatprep.subr.bf16.mxu0 0
    %122 = vmatpush1.bf16.msra.mxu0 0
    %123 = vmatprep.subr.bf16.mxu0 0
    %124 = vmatpush1.bf16.msra.mxu0 %v103
    %125 = vmatprep.subr.bf16.mxu0 0
    %126 = vmatpush2.bf16.msra.mxu0 0
    %127 = vmatprep.subr.bf16.mxu0 0
    %128 = vmatpush2.bf16.msra.mxu0 0
    %129 = vmatprep.subr.bf16.mxu0 0
    %130 = vmatpush2.bf16.msra.mxu0 0
    %131 = vmatprep.subr.bf16.mxu0 0
    %132 = vmatpush2.bf16.msra.mxu0 0
    %133 = vmatprep.subr.bf16.mxu0 0
    %134 = vmatpush2.bf16.msra.mxu0 0
    %135 = vmatprep.subr.bf16.mxu0 0
    %136 = vmatpush2.bf16.msra.mxu0 0
    %137 = vmatprep.subr.bf16.mxu0 0
    %138 = vmatpush2.bf16.msra.mxu0 0
    %139 = vmatprep.subr.bf16.mxu0 0
    %140 = vmatpush2.bf16.msra.mxu0 0
    %141 = vmatprep.mubr.bf16.mxu0 0
    %142 = vmatmul.mubr.bf16.gmra.mxu0 %v107
    %v143 = vpop.f32.mrf.mxu0
    %v144 = vadd.f32 %v94, %v143
    %v145 = vpop.f32.mrf.mxu0
    %v146 = vpop.f32.mrf.mxu0
    %v147 = vpop.f32.mrf.mxu0
    %148 = vdwg.mxu0
    %v149 = vmax.f32 %v144, 0.0
    %v150 = vand.u32 2147483647, %v144
    %v151 = vsub.f32 0.0, %v150
    %v152 = vmul.f32 %v151, 1.442695
    %v153 = vpow.pop %v152
    %v154 = vadd.f32 %v153, 1.0
    %v155 = vlog2.pop %v154
    %v156 = vmul.f32 %v155, 0.6931472
    %v157 = vmul.f32 -0.5, %v153
    %v158 = vadd.f32 %v157, 1.0
    %v159 = vmul.f32 %v158, %v153
    %v160 = vand.u32 2147483647, %v153
    %vm161 = vcmp.lt.f32.partialorder %v160, 0.0004427343
    %v162 = vsel %vm161, %v159, %v156
    %v163 = vadd.f32 %v149, %v162
    %v164 = vtanh.pop %v163
    %v165 = vmul.f32 %v144, %v164
    %v166 = vld [vmem:[%s3] sm:$0xf]
    %v167 = vld [vmem:[%s3 + $0x4] sm:$0xf]
    %v168 = vld [vmem:[%s3 + $0x8] sm:$0xf]
    %v169 = vld [vmem:[%s3 + $0xc] sm:$0xf]
    %v170 = vpack.c.bf16 %v165, %v165
    %v171 = vld [vmem:[#allocation6 + $0x1] sm:$0x1]
    %v173 = vlaneseq
    %v174 = vshrl.u32 %v173, 7
    %v175 = vsub.s32 0, %v174
    %v176 = vrot.slane %v171, %v175
    %v182 = vunpack.c.l.b16 %v166
    %v183 = vunpack.c.l.b16 %v167
    %v184 = vunpack.c.l.b16 %v168
    %v185 = vunpack.c.l.b16 %v169
    %v186 = vpack.c.b16 %v183, %v182
    %v187 = vpack.c.b16 %v185, %v184
    %vm190 = vcmask 261120
    %v192 = vsel %vm190, %v170, 0
    %194 = vmatprep.subr.bf16.mxu0 0
    %195 = vmatpush1.bf16.msra.mxu0 0
    %196 = vmatprep.subr.bf16.mxu0 0
    %197 = vmatpush1.bf16.msra.mxu0 0
    %198 = vmatprep.subr.bf16.mxu0 0
    %199 = vmatpush1.bf16.msra.mxu0 0
    %200 = vmatprep.subr.bf16.mxu0 0
    %201 = vmatpush1.bf16.msra.mxu0 0
    %202 = vmatprep.subr.bf16.mxu0 0
    %203 = vmatpush1.bf16.msra.mxu0 0
    %204 = vmatprep.subr.bf16.mxu0 0
    %205 = vmatpush1.bf16.msra.mxu0 0
    %206 = vmatprep.subr.bf16.mxu0 0
    %207 = vmatpush1.bf16.msra.mxu0 %v187
    %208 = vmatprep.subr.bf16.mxu0 0
    %209 = vmatpush1.bf16.msra.mxu0 %v186
    %210 = vmatprep.subr.bf16.mxu0 0
    %211 = vmatpush2.bf16.msra.mxu0 0
    %212 = vmatprep.subr.bf16.mxu0 0
    %213 = vmatpush2.bf16.msra.mxu0 0
    %214 = vmatprep.subr.bf16.mxu0 0
    %215 = vmatpush2.bf16.msra.mxu0 0
    %216 = vmatprep.subr.bf16.mxu0 0
    %217 = vmatpush2.bf16.msra.mxu0 0
    %218 = vmatprep.subr.bf16.mxu0 0
    %219 = vmatpush2.bf16.msra.mxu0 0
    %220 = vmatprep.subr.bf16.mxu0 0
    %221 = vmatpush2.bf16.msra.mxu0 0
    %222 = vmatprep.subr.bf16.mxu0 0
    %223 = vmatpush2.bf16.msra.mxu0 0
    %224 = vmatprep.subr.bf16.mxu0 0
    %225 = vmatpush2.bf16.msra.mxu0 0
    %226 = vmatprep.mubr.bf16.mxu0 0
    %227 = vmatmul.mubr.bf16.gmra.mxu0 %v192
    %v228 = vpop.f32.mrf.mxu0
    %v229 = vadd.f32 %v176, %v228
    %v230 = vpop.f32.mrf.mxu0
    %v231 = vpop.f32.mrf.mxu0
    %v232 = vpop.f32.mrf.mxu0
    %233 = vdwg.mxu0
    %235 = vrot.lane.b32.xlu0 %v229, 20
    %v236 = vpop.permute.xlu0 %235
    %vm238 = vcmask 162816
    %v239 = vsel %vm238, %v85, %v236
    %v240 = vld [vmem:[%s4] sm:$0xff]
    %v241 = vld [vmem:[%s4 + $0x8] sm:$0xff]
    %v242 = vld [vmem:[%s4 + $0x10] sm:$0xff]
    %v243 = vld [vmem:[%s4 + $0x18] sm:$0xff]
    %v244 = vld [vmem:[%s4 + $0x20] sm:$0xff]
    %v245 = vld [vmem:[%s4 + $0x28] sm:$0xff]
    %v246 = vld [vmem:[%s4 + $0x30] sm:$0xff]
    %v247 = vld [vmem:[%s4 + $0x38] sm:$0xff]
    %v248 = vld [vmem:[%s4 + $0x40] sm:$0xff]
    %v249 = vld [vmem:[%s4 + $0x48] sm:$0xff]
    %v250 = vld [vmem:[%s4 + $0x50] sm:$0xff]
    %v251 = vld [vmem:[%s4 + $0x58] sm:$0xff]
    %v252 = vld [vmem:[%s4 + $0x60] sm:$0x33]
    %v253 = vld [vmem:[%s4 + $0x68] sm:$0x33]
    %v254 = vld [vmem:[%s4 + $0x70] sm:$0x33]
    %v255 = vpack.c.bf16 %v239, %v239
    %v271 = vunpack.c.l.b16 %v240
    %v272 = vunpack.c.h.b16 %v240
    %v273 = vunpack.c.l.b16 %v241
    %v274 = vunpack.c.h.b16 %v241
    %v275 = vunpack.c.l.b16 %v242
    %v276 = vunpack.c.h.b16 %v242
    %v277 = vunpack.c.l.b16 %v243
    %v278 = vunpack.c.h.b16 %v243
    %v279 = vunpack.c.l.b16 %v244
    %v280 = vunpack.c.h.b16 %v244
    %v281 = vunpack.c.l.b16 %v245
    %v282 = vunpack.c.h.b16 %v245
    %v283 = vunpack.c.l.b16 %v246
    %v284 = vunpack.c.h.b16 %v246
    %v285 = vunpack.c.l.b16 %v247
    %v286 = vunpack.c.h.b16 %v247
    %v287 = vunpack.c.l.b16 %v248
    %v288 = vunpack.c.h.b16 %v248
    %v289 = vunpack.c.l.b16 %v249
    %v290 = vunpack.c.h.b16 %v249
    %v291 = vunpack.c.l.b16 %v250
    %v292 = vunpack.c.h.b16 %v250
    %v293 = vunpack.c.l.b16 %v251
    %v294 = vunpack.c.h.b16 %v251
    %v295 = vunpack.c.l.b16 %v252
    %v296 = vunpack.c.h.b16 %v252
    %v297 = vunpack.c.l.b16 %v253
    %v298 = vunpack.c.h.b16 %v253
    %v299 = vunpack.c.l.b16 %v254
    %v300 = vunpack.c.h.b16 %v254
    %v301 = vpack.c.b16 %v277, %v271
    %v302 = vpack.c.b16 %v278, %v272
    %v303 = vpack.c.b16 %v279, %v273
    %v304 = vpack.c.b16 %v280, %v274
    %v305 = vpack.c.b16 %v281, %v275
    %v306 = vpack.c.b16 %v282, %v276
    %v307 = vpack.c.b16 %v289, %v283
    %v308 = vpack.c.b16 %v290, %v284
    %v309 = vpack.c.b16 %v291, %v285
    %v310 = vpack.c.b16 %v292, %v286
    %v311 = vpack.c.b16 %v293, %v287
    %v312 = vpack.c.b16 %v294, %v288
    %v313 = vpack.c.b16 %v295, %v295
    %v314 = vpack.c.b16 %v296, %v296
    %v315 = vpack.c.b16 %v297, %v297
    %v316 = vpack.c.b16 %v298, %v298
    %v317 = vpack.c.b16 %v299, %v299
    %v318 = vpack.c.b16 %v300, %v300
    %vm331 = vcmask 293888
    %v333 = vsel %vm331, %v255, 0
    %vm335 = vcmask 1041408
    %v337 = vsel %vm335, %v313, 0
    %v340 = vsel %vm335, %v314, 0
    %v343 = vsel %vm335, %v315, 0
    %v346 = vsel %vm335, %v316, 0
    %v349 = vsel %vm335, %v317, 0
    %v352 = vsel %vm335, %v318, 0
    %354 = vmatprep.subr.bf16.mxu0 0
    %355 = vmatpush1.bf16.msra.mxu0 0
    %356 = vmatprep.subr.bf16.mxu0 0
    %357 = vmatpush1.bf16.msra.mxu0 0
    %358 = vmatprep.subr.bf16.mxu0 0
    %359 = vmatpush1.bf16.msra.mxu0 0
    %360 = vmatprep.subr.bf16.mxu0 0
    %361 = vmatpush1.bf16.msra.mxu0 0
    %362 = vmatprep.subr.bf16.mxu0 0
    %363 = vmatpush1.bf16.msra.mxu0 0
    %364 = vmatprep.subr.bf16.mxu0 %v340
    %365 = vmatpush1.bf16.msra.mxu0 %v337
    %366 = vmatprep.subr.bf16.mxu0 %v308
    %367 = vmatpush1.bf16.msra.mxu0 %v307
    %368 = vmatprep.subr.bf16.mxu0 %v302
    %369 = vmatpush1.bf16.msra.mxu0 %v301
    %370 = vmatprep.subr.bf16.mxu0 0
    %371 = vmatpush2.bf16.msra.mxu0 0
    %372 = vmatprep.subr.bf16.mxu0 0
    %373 = vmatpush2.bf16.msra.mxu0 0
    %374 = vmatprep.subr.bf16.mxu0 0
    %375 = vmatpush2.bf16.msra.mxu0 0
    %376 = vmatprep.subr.bf16.mxu0 0
    %377 = vmatpush2.bf16.msra.mxu0 0
    %378 = vmatprep.subr.bf16.mxu0 0
    %379 = vmatpush2.bf16.msra.mxu0 0
    %380 = vmatprep.subr.bf16.mxu0 0
    %381 = vmatpush2.bf16.msra.mxu0 0
    %382 = vmatprep.subr.bf16.mxu0 0
    %383 = vmatpush2.bf16.msra.mxu0 0
    %384 = vmatprep.subr.bf16.mxu0 0
    %385 = vmatpush2.bf16.msra.mxu0 0
    %386 = vmatprep.mubr.bf16.mxu0 0
    %387 = vmatmul.mubr.bf16.gmra.mxu0 %v333
    %v388 = vpop.f32.mrf.mxu0
    %v389 = vadd.f32 0.0, %v388
    %v390 = vpop.f32.mrf.mxu0
    %v391 = vadd.f32 0.0, %v390
    %v392 = vpop.f32.mrf.mxu0
    %v393 = vpop.f32.mrf.mxu0
    %394 = vdwg.mxu0
    %395 = vmatprep.subr.bf16.mxu0 0
    %396 = vmatpush1.bf16.msra.mxu0 0
    %397 = vmatprep.subr.bf16.mxu0 0
    %398 = vmatpush1.bf16.msra.mxu0 0
    %399 = vmatprep.subr.bf16.mxu0 0
    %400 = vmatpush1.bf16.msra.mxu0 0
    %401 = vmatprep.subr.bf16.mxu0 0
    %402 = vmatpush1.bf16.msra.mxu0 0
    %403 = vmatprep.subr.bf16.mxu0 0
    %404 = vmatpush1.bf16.msra.mxu0 0
    %405 = vmatprep.subr.bf16.mxu0 %v346
    %406 = vmatpush1.bf16.msra.mxu0 %v343
    %407 = vmatprep.subr.bf16.mxu0 %v310
    %408 = vmatpush1.bf16.msra.mxu0 %v309
    %409 = vmatprep.subr.bf16.mxu0 %v304
    %410 = vmatpush1.bf16.msra.mxu0 %v303
    %411 = vmatprep.subr.bf16.mxu0 0
    %412 = vmatpush2.bf16.msra.mxu0 0
    %413 = vmatprep.subr.bf16.mxu0 0
    %414 = vmatpush2.bf16.msra.mxu0 0
    %415 = vmatprep.subr.bf16.mxu0 0
    %416 = vmatpush2.bf16.msra.mxu0 0
    %417 = vmatprep.subr.bf16.mxu0 0
    %418 = vmatpush2.bf16.msra.mxu0 0
    %419 = vmatprep.subr.bf16.mxu0 0
    %420 = vmatpush2.bf16.msra.mxu0 0
    %421 = vmatprep.subr.bf16.mxu0 0
    %422 = vmatpush2.bf16.msra.mxu0 0
    %423 = vmatprep.subr.bf16.mxu0 0
    %424 = vmatpush2.bf16.msra.mxu0 0
    %425 = vmatprep.subr.bf16.mxu0 0
    %426 = vmatpush2.bf16.msra.mxu0 0
    %427 = vmatprep.mubr.bf16.mxu0 0
    %428 = vmatmul.mubr.bf16.gmra.mxu0 %v333
    %v429 = vpop.f32.mrf.mxu0
    %v430 = vadd.f32 0.0, %v429
    %v431 = vpop.f32.mrf.mxu0
    %v432 = vadd.f32 0.0, %v431
    %v433 = vpop.f32.mrf.mxu0
    %v434 = vpop.f32.mrf.mxu0
    %435 = vdwg.mxu0
    %436 = vmatprep.subr.bf16.mxu0 0
    %437 = vmatpush1.bf16.msra.mxu0 0
    %438 = vmatprep.subr.bf16.mxu0 0
    %439 = vmatpush1.bf16.msra.mxu0 0
    %440 = vmatprep.subr.bf16.mxu0 0
    %441 = vmatpush1.bf16.msra.mxu0 0
    %442 = vmatprep.subr.bf16.mxu0 0
    %443 = vmatpush1.bf16.msra.mxu0 0
    %444 = vmatprep.subr.bf16.mxu0 0
    %445 = vmatpush1.bf16.msra.mxu0 0
    %446 = vmatprep.subr.bf16.mxu0 %v352
    %447 = vmatpush1.bf16.msra.mxu0 %v349
    %448 = vmatprep.subr.bf16.mxu0 %v312
    %449 = vmatpush1.bf16.msra.mxu0 %v311
    %450 = vmatprep.subr.bf16.mxu0 %v306
    %451 = vmatpush1.bf16.msra.mxu0 %v305
    %452 = vmatprep.subr.bf16.mxu0 0
    %453 = vmatpush2.bf16.msra.mxu0 0
    %454 = vmatprep.subr.bf16.mxu0 0
    %455 = vmatpush2.bf16.msra.mxu0 0
    %456 = vmatprep.subr.bf16.mxu0 0
    %457 = vmatpush2.bf16.msra.mxu0 0
    %458 = vmatprep.subr.bf16.mxu0 0
    %459 = vmatpush2.bf16.msra.mxu0 0
    %460 = vmatprep.subr.bf16.mxu0 0
    %461 = vmatpush2.bf16.msra.mxu0 0
    %462 = vmatprep.subr.bf16.mxu0 0
    %463 = vmatpush2.bf16.msra.mxu0 0
    %464 = vmatprep.subr.bf16.mxu0 0
    %465 = vmatpush2.bf16.msra.mxu0 0
    %466 = vmatprep.subr.bf16.mxu0 0
    %467 = vmatpush2.bf16.msra.mxu0 0
    %468 = vmatprep.mubr.bf16.mxu0 0
    %469 = vmatmul.mubr.bf16.gmra.mxu0 %v333
    %v470 = vpop.f32.mrf.mxu0
    %v471 = vadd.f32 0.0, %v470
    %v472 = vpop.f32.mrf.mxu0
    %v473 = vadd.f32 0.0, %v472
    %v474 = vpop.f32.mrf.mxu0
    %v475 = vpop.f32.mrf.mxu0
    %476 = vdwg.mxu0
    %v477 = vld [vmem:[#allocation6 + $0x2] sm:$0x3]
    %v479 = vlaneseq
    %v480 = vshrl.u32 %v479, 7
    %v481 = vsub.s32 0, %v480
    %v482 = vrot.slane %v477, %v481
    %v483 = vlaneseq
    %v484 = vshrl.u32 %v483, 7
    %v485 = vsub.s32 1, %v484
    %v486 = vrot.slane %v477, %v485
    %v489 = vadd.f32 %v389, %v482
    %v490 = vadd.f32 %v391, %v486
    %v491 = vmax.f32 %v489, 0.0
    %v492 = vmax.f32 %v490, 0.0
    %v493 = vand.u32 2147483647, %v489
    %v494 = vand.u32 2147483647, %v490
    %v495 = vsub.f32 0.0, %v493
    %v496 = vsub.f32 0.0, %v494
    %v497 = vmul.f32 %v495, 1.442695
    %v498 = vpow.pop %v497
    %v499 = vmul.f32 %v496, 1.442695
    %v500 = vpow.pop %v499
    %v501 = vadd.f32 %v498, 1.0
    %v502 = vlog2.pop %v501
    %v503 = vmul.f32 %v502, 0.6931472
    %v504 = vmul.f32 -0.5, %v498
    %v505 = vadd.f32 %v504, 1.0
    %v506 = vmul.f32 %v505, %v498
    %v507 = vand.u32 2147483647, %v498
    %vm508 = vcmp.lt.f32.partialorder %v507, 0.0004427343
    %v509 = vsel %vm508, %v506, %v503
    %v510 = vadd.f32 %v500, 1.0
    %v511 = vlog2.pop %v510
    %v512 = vmul.f32 %v511, 0.6931472
    %v513 = vmul.f32 -0.5, %v500
    %v514 = vadd.f32 %v513, 1.0
    %v515 = vmul.f32 %v514, %v500
    %v516 = vand.u32 2147483647, %v500
    %vm517 = vcmp.lt.f32.partialorder %v516, 0.0004427343
    %v518 = vsel %vm517, %v515, %v512
    %v519 = vadd.f32 %v491, %v509
    %v520 = vadd.f32 %v492, %v518
    %v521 = vtanh.pop %v519
    %v522 = vtanh.pop %v520
    %v523 = vmul.f32 %v489, %v521
    %v524 = vmul.f32 %v490, %v522
    %v525 = vld [vmem:[#allocation6 + $0x6] sm:$0x3]
    %v527 = vlaneseq
    %v528 = vshrl.u32 %v527, 7
    %v529 = vsub.s32 0, %v528
    %v530 = vrot.slane %v525, %v529
    %v531 = vlaneseq
    %v532 = vshrl.u32 %v531, 7
    %v533 = vsub.s32 1, %v532
    %v534 = vrot.slane %v525, %v533
    %v537 = vadd.f32 %v430, %v530
    %v538 = vadd.f32 %v432, %v534
    %v539 = vmax.f32 %v537, 0.0
    %v540 = vmax.f32 %v538, 0.0
    %v541 = vand.u32 2147483647, %v537
    %v542 = vand.u32 2147483647, %v538
    %v543 = vsub.f32 0.0, %v541
    %v544 = vsub.f32 0.0, %v542
    %v545 = vmul.f32 %v543, 1.442695
    %v546 = vpow.pop %v545
    %v547 = vmul.f32 %v544, 1.442695
    %v548 = vpow.pop %v547
    %v549 = vadd.f32 %v546, 1.0
    %v550 = vlog2.pop %v549
    %v551 = vmul.f32 %v550, 0.6931472
    %v552 = vmul.f32 -0.5, %v546
    %v553 = vadd.f32 %v552, 1.0
    %v554 = vmul.f32 %v553, %v546
    %v555 = vand.u32 2147483647, %v546
    %vm556 = vcmp.lt.f32.partialorder %v555, 0.0004427343
    %v557 = vsel %vm556, %v554, %v551
    %v558 = vadd.f32 %v548, 1.0
    %v559 = vlog2.pop %v558
    %v560 = vmul.f32 %v559, 0.6931472
    %v561 = vmul.f32 -0.5, %v548
    %v562 = vadd.f32 %v561, 1.0
    %v563 = vmul.f32 %v562, %v548
    %v564 = vand.u32 2147483647, %v548
    %vm565 = vcmp.lt.f32.partialorder %v564, 0.0004427343
    %v566 = vsel %vm565, %v563, %v560
    %v567 = vadd.f32 %v539, %v557
    %v568 = vadd.f32 %v540, %v566
    %v569 = vtanh.pop %v567
    %v570 = vtanh.pop %v568
    %v571 = vmul.f32 %v537, %v569
    %v572 = vmul.f32 %v538, %v570
    %s573 = smul.u32 4, 32
    %s574 = smul.u32 %s573, 8
    %s575 = sshll.u32 %s574, 4
    %576 = dma.done [#allocation5], %s575
    %v577 = vld [vmem:[#allocation2] sm:$0xff]
    %v578 = vld [vmem:[#allocation2 + $0x20] sm:$0xff]
    %v579 = vld [vmem:[#allocation2 + $0x40] sm:$0xff]
    %v580 = vld [vmem:[#allocation2 + $0x60] sm:$0xff]
    %v581 = vld [vmem:[#allocation2 + $0x80] sm:$0xff]
    %v582 = vld [vmem:[#allocation2 + $0xa0] sm:$0xff]
    %v583 = vld [vmem:[#allocation2 + $0xc0] sm:$0xff]
    %v584 = vld [vmem:[#allocation2 + $0xe0] sm:$0xff]
    %v585 = vld [vmem:[#allocation2 + $0x100] sm:$0xff]
    %v586 = vld [vmem:[#allocation2 + $0x120] sm:$0xff]
    %v587 = vld [vmem:[#allocation2 + $0x140] sm:$0xff]
    %v588 = vld [vmem:[#allocation2 + $0x160] sm:$0xff]
    %v589 = vld [vmem:[#allocation2 + $0x180] sm:$0xff]
    %v590 = vld [vmem:[#allocation2 + $0x1a0] sm:$0xff]
    %v591 = vld [vmem:[#allocation2 + $0x1c0] sm:$0xff]
    %v592 = vld [vmem:[#allocation2 + $0x1e0] sm:$0xff]
    %v593 = vld [vmem:[#allocation2 + $0x200] sm:$0xff]
    %v594 = vld [vmem:[#allocation2 + $0x220] sm:$0xff]
    %v595 = vld [vmem:[#allocation2 + $0x240] sm:$0xff]
    %v596 = vld [vmem:[#allocation2 + $0x260] sm:$0xff]
    %v597 = vld [vmem:[#allocation2 + $0x280] sm:$0xff]
    %v598 = vld [vmem:[#allocation2 + $0x2a0] sm:$0xff]
    %v599 = vld [vmem:[#allocation2 + $0x2c0] sm:$0xff]
    %v600 = vld [vmem:[#allocation2 + $0x2e0] sm:$0xff]
    %v601 = vld [vmem:[#allocation2 + $0x300] sm:$0xff]
    %v602 = vld [vmem:[#allocation2 + $0x320] sm:$0xff]
    %v603 = vld [vmem:[#allocation2 + $0x340] sm:$0xff]
    %v604 = vld [vmem:[#allocation2 + $0x360] sm:$0xff]
    %v605 = vld [vmem:[#allocation2 + $0x380] sm:$0xff]
    %v606 = vld [vmem:[#allocation2 + $0x3a0] sm:$0xff]
    %v607 = vld [vmem:[#allocation2 + $0x3c0] sm:$0xff]
    %v608 = vld [vmem:[#allocation2 + $0x3e0] sm:$0xff]
    %v609 = vpack.c.bf16 %v571, %v571
    %v610 = vpack.c.bf16 %v572, %v572
    %v643 = vunpack.c.l.b16 %v577
    %v644 = vunpack.c.h.b16 %v577
    %v645 = vunpack.c.l.b16 %v578
    %v646 = vunpack.c.h.b16 %v578
    %v647 = vunpack.c.l.b16 %v579
    %v648 = vunpack.c.h.b16 %v579
    %v649 = vunpack.c.l.b16 %v580
    %v650 = vunpack.c.h.b16 %v580
    %v651 = vunpack.c.l.b16 %v581
    %v652 = vunpack.c.h.b16 %v581
    %v653 = vunpack.c.l.b16 %v582
    %v654 = vunpack.c.h.b16 %v582
    %v655 = vunpack.c.l.b16 %v583
    %v656 = vunpack.c.h.b16 %v583
    %v657 = vunpack.c.l.b16 %v584
    %v658 = vunpack.c.h.b16 %v584
    %v659 = vunpack.c.l.b16 %v585
    %v660 = vunpack.c.h.b16 %v585
    %v661 = vunpack.c.l.b16 %v586
    %v662 = vunpack.c.h.b16 %v586
    %v663 = vunpack.c.l.b16 %v587
    %v664 = vunpack.c.h.b16 %v587
    %v665 = vunpack.c.l.b16 %v588
    %v666 = vunpack.c.h.b16 %v588
    %v667 = vunpack.c.l.b16 %v589
    %v668 = vunpack.c.h.b16 %v589
    %v669 = vunpack.c.l.b16 %v590
    %v670 = vunpack.c.h.b16 %v590
    %v671 = vunpack.c.l.b16 %v591
    %v672 = vunpack.c.h.b16 %v591
    %v673 = vunpack.c.l.b16 %v592
    %v674 = vunpack.c.h.b16 %v592
    %v675 = vunpack.c.l.b16 %v593
    %v676 = vunpack.c.h.b16 %v593
    %v677 = vunpack.c.l.b16 %v594
    %v678 = vunpack.c.h.b16 %v594
    %v679 = vunpack.c.l.b16 %v595
    %v680 = vunpack.c.h.b16 %v595
    %v681 = vunpack.c.l.b16 %v596
    %v682 = vunpack.c.h.b16 %v596
    %v683 = vunpack.c.l.b16 %v597
    %v684 = vunpack.c.h.b16 %v597
    %v685 = vunpack.c.l.b16 %v598
    %v686 = vunpack.c.h.b16 %v598
    %v687 = vunpack.c.l.b16 %v599
    %v688 = vunpack.c.h.b16 %v599
    %v689 = vunpack.c.l.b16 %v600
    %v690 = vunpack.c.h.b16 %v600
    %v691 = vunpack.c.l.b16 %v601
    %v692 = vunpack.c.h.b16 %v601
    %v693 = vunpack.c.l.b16 %v602
    %v694 = vunpack.c.h.b16 %v602
    %v695 = vunpack.c.l.b16 %v603
    %v696 = vunpack.c.h.b16 %v603
    %v697 = vunpack.c.l.b16 %v604
    %v698 = vunpack.c.h.b16 %v604
    %v699 = vunpack.c.l.b16 %v605
    %v700 = vunpack.c.h.b16 %v605
    %v701 = vunpack.c.l.b16 %v606
    %v702 = vunpack.c.h.b16 %v606
    %v703 = vunpack.c.l.b16 %v607
    %v704 = vunpack.c.h.b16 %v607
    %v705 = vunpack.c.l.b16 %v608
    %v706 = vunpack.c.h.b16 %v608
    %v707 = vpack.c.b16 %v645, %v643
    %v708 = vpack.c.b16 %v646, %v644
    %v709 = vpack.c.b16 %v649, %v647
    %v710 = vpack.c.b16 %v650, %v648
    %v711 = vpack.c.b16 %v653, %v651
    %v712 = vpack.c.b16 %v654, %v652
    %v713 = vpack.c.b16 %v657, %v655
    %v714 = vpack.c.b16 %v658, %v656
    %v715 = vpack.c.b16 %v661, %v659
    %v716 = vpack.c.b16 %v662, %v660
    %v717 = vpack.c.b16 %v665, %v663
    %v718 = vpack.c.b16 %v666, %v664
    %v719 = vpack.c.b16 %v669, %v667
    %v720 = vpack.c.b16 %v670, %v668
    %v721 = vpack.c.b16 %v673, %v671
    %v722 = vpack.c.b16 %v674, %v672
    %v723 = vpack.c.b16 %v677, %v675
    %v724 = vpack.c.b16 %v678, %v676
    %v725 = vpack.c.b16 %v681, %v679
    %v726 = vpack.c.b16 %v682, %v680
    %v727 = vpack.c.b16 %v685, %v683
    %v728 = vpack.c.b16 %v686, %v684
    %v729 = vpack.c.b16 %v689, %v687
    %v730 = vpack.c.b16 %v690, %v688
    %v731 = vpack.c.b16 %v693, %v691
    %v732 = vpack.c.b16 %v694, %v692
    %v733 = vpack.c.b16 %v697, %v695
    %v734 = vpack.c.b16 %v698, %v696
    %v735 = vpack.c.b16 %v701, %v699
    %v736 = vpack.c.b16 %v702, %v700
    %v737 = vpack.c.b16 %v705, %v703
    %v738 = vpack.c.b16 %v706, %v704
    %771 = vmatprep.subr.bf16.mxu0 %v722
    %772 = vmatpush1.bf16.msra.mxu0 %v721
    %773 = vmatprep.subr.bf16.mxu0 %v720
    %774 = vmatpush1.bf16.msra.mxu0 %v719
    %775 = vmatprep.subr.bf16.mxu0 %v718
    %776 = vmatpush1.bf16.msra.mxu0 %v717
    %777 = vmatprep.subr.bf16.mxu0 %v716
    %778 = vmatpush1.bf16.msra.mxu0 %v715
    %779 = vmatprep.subr.bf16.mxu0 %v714
    %780 = vmatpush1.bf16.msra.mxu0 %v713
    %781 = vmatprep.subr.bf16.mxu0 %v712
    %782 = vmatpush1.bf16.msra.mxu0 %v711
    %783 = vmatprep.subr.bf16.mxu0 %v710
    %784 = vmatpush1.bf16.msra.mxu0 %v709
    %785 = vmatprep.subr.bf16.mxu0 %v708
    %786 = vmatpush1.bf16.msra.mxu0 %v707
    %787 = vmatprep.subr.bf16.mxu0 %v738
    %788 = vmatpush2.bf16.msra.mxu0 %v737
    %789 = vmatprep.subr.bf16.mxu0 %v736
    %790 = vmatpush2.bf16.msra.mxu0 %v735
    %791 = vmatprep.subr.bf16.mxu0 %v734
    %792 = vmatpush2.bf16.msra.mxu0 %v733
    %793 = vmatprep.subr.bf16.mxu0 %v732
    %794 = vmatpush2.bf16.msra.mxu0 %v731
    %795 = vmatprep.subr.bf16.mxu0 %v730
    %796 = vmatpush2.bf16.msra.mxu0 %v729
    %797 = vmatprep.subr.bf16.mxu0 %v728
    %798 = vmatpush2.bf16.msra.mxu0 %v727
    %799 = vmatprep.subr.bf16.mxu0 %v726
    %800 = vmatpush2.bf16.msra.mxu0 %v725
    %801 = vmatprep.subr.bf16.mxu0 %v724
    %802 = vmatpush2.bf16.msra.mxu0 %v723
    %803 = vmatprep.mubr.bf16.mxu0 %v610
    %804 = vmatmul.mubr.bf16.gmra.mxu0 %v609
    %v805 = vpop.f32.mrf.mxu0
    %v806 = vadd.f32 %v471, %v805
    %v807 = vpop.f32.mrf.mxu0
    %v808 = vadd.f32 %v473, %v807
    %v809 = vpop.f32.mrf.mxu0
    %v810 = vpop.f32.mrf.mxu0
    %811 = vdwg.mxu0
    %v812 = vld [vmem:[#allocation6 + $0x8] sm:$0x3]
    %v814 = vlaneseq
    %v815 = vshrl.u32 %v814, 7
    %v816 = vsub.s32 0, %v815
    %v817 = vrot.slane %v812, %v816
    %v818 = vlaneseq
    %v819 = vshrl.u32 %v818, 7
    %v820 = vsub.s32 1, %v819
    %v821 = vrot.slane %v812, %v820
    %v824 = vadd.f32 %v806, %v817
    %v825 = vadd.f32 %v808, %v821
    %v826 = vmax.f32 %v824, 0.0
    %v827 = vmax.f32 %v825, 0.0
    %v828 = vand.u32 2147483647, %v824
    %v829 = vand.u32 2147483647, %v825
    %v830 = vsub.f32 0.0, %v828
    %v831 = vsub.f32 0.0, %v829
    %v832 = vmul.f32 %v830, 1.442695
    %v833 = vpow.pop %v832
    %v834 = vmul.f32 %v831, 1.442695
    %v835 = vpow.pop %v834
    %v836 = vadd.f32 %v833, 1.0
    %v837 = vlog2.pop %v836
    %v838 = vmul.f32 %v837, 0.6931472
    %v839 = vmul.f32 -0.5, %v833
    %v840 = vadd.f32 %v839, 1.0
    %v841 = vmul.f32 %v840, %v833
    %v842 = vand.u32 2147483647, %v833
    %vm843 = vcmp.lt.f32.partialorder %v842, 0.0004427343
    %v844 = vsel %vm843, %v841, %v838
    %v845 = vadd.f32 %v835, 1.0
    %v846 = vlog2.pop %v845
    %v847 = vmul.f32 %v846, 0.6931472
    %v848 = vmul.f32 -0.5, %v835
    %v849 = vadd.f32 %v848, 1.0
    %v850 = vmul.f32 %v849, %v835
    %v851 = vand.u32 2147483647, %v835
    %vm852 = vcmp.lt.f32.partialorder %v851, 0.0004427343
    %v853 = vsel %vm852, %v850, %v847
    %v854 = vadd.f32 %v826, %v844
    %v855 = vadd.f32 %v827, %v853
    %v856 = vtanh.pop %v854
    %v857 = vtanh.pop %v855
    %v858 = vmul.f32 %v824, %v856
    %v859 = vmul.f32 %v825, %v857
    %v860 = vld [vmem:[#allocation2 + $0x8] sm:$0xff]
    %v861 = vld [vmem:[#allocation2 + $0x10] sm:$0xff]
    %v862 = vld [vmem:[#allocation2 + $0x18] sm:$0xff]
    %v863 = vld [vmem:[#allocation2 + $0x28] sm:$0xff]
    %v864 = vld [vmem:[#allocation2 + $0x30] sm:$0xff]
    %v865 = vld [vmem:[#allocation2 + $0x38] sm:$0xff]
    %v866 = vld [vmem:[#allocation2 + $0x48] sm:$0xff]
    %v867 = vld [vmem:[#allocation2 + $0x50] sm:$0xff]
    %v868 = vld [vmem:[#allocation2 + $0x58] sm:$0xff]
    %v869 = vld [vmem:[#allocation2 + $0x68] sm:$0xff]
    %v870 = vld [vmem:[#allocation2 + $0x70] sm:$0xff]
    %v871 = vld [vmem:[#allocation2 + $0x78] sm:$0xff]
    %v872 = vld [vmem:[#allocation2 + $0x88] sm:$0xff]
    %v873 = vld [vmem:[#allocation2 + $0x90] sm:$0xff]
    %v874 = vld [vmem:[#allocation2 + $0x98] sm:$0xff]
    %v875 = vld [vmem:[#allocation2 + $0xa8] sm:$0xff]
    %v876 = vld [vmem:[#allocation2 + $0xb0] sm:$0xff]
    %v877 = vld [vmem:[#allocation2 + $0xb8] sm:$0xff]
    %v878 = vld [vmem:[#allocation2 + $0xc8] sm:$0xff]
    %v879 = vld [vmem:[#allocation2 + $0xd0] sm:$0xff]
    %v880 = vld [vmem:[#allocation2 + $0xd8] sm:$0xff]
    %v881 = vld [vmem:[#allocation2 + $0xe8] sm:$0xff]
    %v882 = vld [vmem:[#allocation2 + $0xf0] sm:$0xff]
    %v883 = vld [vmem:[#allocation2 + $0xf8] sm:$0xff]
    %v884 = vld [vmem:[#allocation2 + $0x108] sm:$0xff]
    %v885 = vld [vmem:[#allocation2 + $0x110] sm:$0xff]
    %v886 = vld [vmem:[#allocation2 + $0x118] sm:$0xff]
    %v887 = vld [vmem:[#allocation2 + $0x128] sm:$0xff]
    %v888 = vld [vmem:[#allocation2 + $0x130] sm:$0xff]
    %v889 = vld [vmem:[#allocation2 + $0x138] sm:$0xff]
    %v890 = vld [vmem:[#allocation2 + $0x148] sm:$0xff]
    %v891 = vld [vmem:[#allocation2 + $0x150] sm:$0xff]
    %v892 = vld [vmem:[#allocation2 + $0x158] sm:$0xff]
    %v893 = vld [vmem:[#allocation2 + $0x168] sm:$0xff]
    %v894 = vld [vmem:[#allocation2 + $0x170] sm:$0xff]
    %v895 = vld [vmem:[#allocation2 + $0x178] sm:$0xff]
    %v896 = vld [vmem:[#allocation2 + $0x188] sm:$0xff]
    %v897 = vld [vmem:[#allocation2 + $0x190] sm:$0xff]
    %v898 = vld [vmem:[#allocation2 + $0x198] sm:$0xff]
    %v899 = vld [vmem:[#allocation2 + $0x1a8] sm:$0xff]
    %v900 = vld [vmem:[#allocation2 + $0x1b0] sm:$0xff]
    %v901 = vld [vmem:[#allocation2 + $0x1b8] sm:$0xff]
    %v902 = vld [vmem:[#allocation2 + $0x1c8] sm:$0xff]
    %v903 = vld [vmem:[#allocation2 + $0x1d0] sm:$0xff]
    %v904 = vld [vmem:[#allocation2 + $0x1d8] sm:$0xff]
    %v905 = vld [vmem:[#allocation2 + $0x1e8] sm:$0xff]
    %v906 = vld [vmem:[#allocation2 + $0x1f0] sm:$0xff]
    %v907 = vld [vmem:[#allocation2 + $0x1f8] sm:$0xff]
    %v908 = vld [vmem:[#allocation2 + $0x208] sm:$0xff]
    %v909 = vld [vmem:[#allocation2 + $0x210] sm:$0xff]
    %v910 = vld [vmem:[#allocation2 + $0x218] sm:$0xff]
    %v911 = vld [vmem:[#allocation2 + $0x228] sm:$0xff]
    %v912 = vld [vmem:[#allocation2 + $0x230] sm:$0xff]
    %v913 = vld [vmem:[#allocation2 + $0x238] sm:$0xff]
    %v914 = vld [vmem:[#allocation2 + $0x248] sm:$0xff]
    %v915 = vld [vmem:[#allocation2 + $0x250] sm:$0xff]
    %v916 = vld [vmem:[#allocation2 + $0x258] sm:$0xff]
    %v917 = vld [vmem:[#allocation2 + $0x268] sm:$0xff]
    %v918 = vld [vmem:[#allocation2 + $0x270] sm:$0xff]
    %v919 = vld [vmem:[#allocation2 + $0x278] sm:$0xff]
    %v920 = vld [vmem:[#allocation2 + $0x288] sm:$0xff]
    %v921 = vld [vmem:[#allocation2 + $0x290] sm:$0xff]
    %v922 = vld [vmem:[#allocation2 + $0x298] sm:$0xff]
    %v923 = vld [vmem:[#allocation2 + $0x2a8] sm:$0xff]
    %v924 = vld [vmem:[#allocation2 + $0x2b0] sm:$0xff]
    %v925 = vld [vmem:[#allocation2 + $0x2b8] sm:$0xff]
    %v926 = vld [vmem:[#allocation2 + $0x2c8] sm:$0xff]
    %v927 = vld [vmem:[#allocation2 + $0x2d0] sm:$0xff]
    %v928 = vld [vmem:[#allocation2 + $0x2d8] sm:$0xff]
    %v929 = vld [vmem:[#allocation2 + $0x2e8] sm:$0xff]
    %v930 = vld [vmem:[#allocation2 + $0x2f0] sm:$0xff]
    %v931 = vld [vmem:[#allocation2 + $0x2f8] sm:$0xff]
    %v932 = vld [vmem:[#allocation2 + $0x308] sm:$0xff]
    %v933 = vld [vmem:[#allocation2 + $0x310] sm:$0xff]
    %v934 = vld [vmem:[#allocation2 + $0x318] sm:$0xff]
    %v935 = vld [vmem:[#allocation2 + $0x328] sm:$0xff]
    %v936 = vld [vmem:[#allocation2 + $0x330] sm:$0xff]
    %v937 = vld [vmem:[#allocation2 + $0x338] sm:$0xff]
    %v938 = vld [vmem:[#allocation2 + $0x348] sm:$0xff]
    %v939 = vld [vmem:[#allocation2 + $0x350] sm:$0xff]
    %v940 = vld [vmem:[#allocation2 + $0x358] sm:$0xff]
    %v941 = vld [vmem:[#allocation2 + $0x368] sm:$0xff]
    %v942 = vld [vmem:[#allocation2 + $0x370] sm:$0xff]
    %v943 = vld [vmem:[#allocation2 + $0x378] sm:$0xff]
    %v944 = vld [vmem:[#allocation2 + $0x388] sm:$0xff]
    %v945 = vld [vmem:[#allocation2 + $0x390] sm:$0xff]
    %v946 = vld [vmem:[#allocation2 + $0x398] sm:$0xff]
    %v947 = vld [vmem:[#allocation2 + $0x3a8] sm:$0xff]
    %v948 = vld [vmem:[#allocation2 + $0x3b0] sm:$0xff]
    %v949 = vld [vmem:[#allocation2 + $0x3b8] sm:$0xff]
    %v950 = vld [vmem:[#allocation2 + $0x3c8] sm:$0xff]
    %v951 = vld [vmem:[#allocation2 + $0x3d0] sm:$0xff]
    %v952 = vld [vmem:[#allocation2 + $0x3d8] sm:$0xff]
    %v953 = vld [vmem:[#allocation2 + $0x3e8] sm:$0xff]
    %v954 = vld [vmem:[#allocation2 + $0x3f0] sm:$0xff]
    %v955 = vld [vmem:[#allocation2 + $0x3f8] sm:$0xff]
    %v956 = vpack.c.bf16 %v858, %v858
    %v957 = vpack.c.bf16 %v859, %v859
    %v958 = vld [vmem:[#allocation6 + $0xa] sm:$0x3f]
    %v960 = vlaneseq
    %v961 = vshrl.u32 %v960, 7
    %v962 = vsub.s32 0, %v961
    %v963 = vrot.slane %v958, %v962
    %v964 = vlaneseq
    %v965 = vshrl.u32 %v964, 7
    %v966 = vsub.s32 1, %v965
    %v967 = vrot.slane %v958, %v966
    %v968 = vlaneseq
    %v969 = vshrl.u32 %v968, 7
    %v970 = vsub.s32 2, %v969
    %v971 = vrot.slane %v958, %v970
    %v972 = vlaneseq
    %v973 = vshrl.u32 %v972, 7
    %v974 = vsub.s32 3, %v973
    %v975 = vrot.slane %v958, %v974
    %v976 = vlaneseq
    %v977 = vshrl.u32 %v976, 7
    %v978 = vsub.s32 4, %v977
    %v979 = vrot.slane %v958, %v978
    %v980 = vlaneseq
    %v981 = vshrl.u32 %v980, 7
    %v982 = vsub.s32 5, %v981
    %v983 = vrot.slane %v958, %v982
    %v1086 = vunpack.c.l.b16 %v860
    %v1087 = vunpack.c.h.b16 %v860
    %v1088 = vunpack.c.l.b16 %v861
    %v1089 = vunpack.c.h.b16 %v861
    %v1090 = vunpack.c.l.b16 %v862
    %v1091 = vunpack.c.h.b16 %v862
    %v1092 = vunpack.c.l.b16 %v863
    %v1093 = vunpack.c.h.b16 %v863
    %v1094 = vunpack.c.l.b16 %v864
    %v1095 = vunpack.c.h.b16 %v864
    %v1096 = vunpack.c.l.b16 %v865
    %v1097 = vunpack.c.h.b16 %v865
    %v1098 = vunpack.c.l.b16 %v866
    %v1099 = vunpack.c.h.b16 %v866
    %v1100 = vunpack.c.l.b16 %v867
    %v1101 = vunpack.c.h.b16 %v867
    %v1102 = vunpack.c.l.b16 %v868
    %v1103 = vunpack.c.h.b16 %v868
    %v1104 = vunpack.c.l.b16 %v869
    %v1105 = vunpack.c.h.b16 %v869
    %v1106 = vunpack.c.l.b16 %v870
    %v1107 = vunpack.c.h.b16 %v870
    %v1108 = vunpack.c.l.b16 %v871
    %v1109 = vunpack.c.h.b16 %v871
    %v1110 = vunpack.c.l.b16 %v872
    %v1111 = vunpack.c.h.b16 %v872
    %v1112 = vunpack.c.l.b16 %v873
    %v1113 = vunpack.c.h.b16 %v873
    %v1114 = vunpack.c.l.b16 %v874
    %v1115 = vunpack.c.h.b16 %v874
    %v1116 = vunpack.c.l.b16 %v875
    %v1117 = vunpack.c.h.b16 %v875
    %v1118 = vunpack.c.l.b16 %v876
    %v1119 = vunpack.c.h.b16 %v876
    %v1120 = vunpack.c.l.b16 %v877
    %v1121 = vunpack.c.h.b16 %v877
    %v1122 = vunpack.c.l.b16 %v878
    %v1123 = vunpack.c.h.b16 %v878
    %v1124 = vunpack.c.l.b16 %v879
    %v1125 = vunpack.c.h.b16 %v879
    %v1126 = vunpack.c.l.b16 %v880
    %v1127 = vunpack.c.h.b16 %v880
    %v1128 = vunpack.c.l.b16 %v881
    %v1129 = vunpack.c.h.b16 %v881
    %v1130 = vunpack.c.l.b16 %v882
    %v1131 = vunpack.c.h.b16 %v882
    %v1132 = vunpack.c.l.b16 %v883
    %v1133 = vunpack.c.h.b16 %v883
    %v1134 = vunpack.c.l.b16 %v884
    %v1135 = vunpack.c.h.b16 %v884
    %v1136 = vunpack.c.l.b16 %v885
    %v1137 = vunpack.c.h.b16 %v885
    %v1138 = vunpack.c.l.b16 %v886
    %v1139 = vunpack.c.h.b16 %v886
    %v1140 = vunpack.c.l.b16 %v887
    %v1141 = vunpack.c.h.b16 %v887
    %v1142 = vunpack.c.l.b16 %v888
    %v1143 = vunpack.c.h.b16 %v888
    %v1144 = vunpack.c.l.b16 %v889
    %v1145 = vunpack.c.h.b16 %v889
    %v1146 = vunpack.c.l.b16 %v890
    %v1147 = vunpack.c.h.b16 %v890
    %v1148 = vunpack.c.l.b16 %v891
    %v1149 = vunpack.c.h.b16 %v891
    %v1150 = vunpack.c.l.b16 %v892
    %v1151 = vunpack.c.h.b16 %v892
    %v1152 = vunpack.c.l.b16 %v893
    %v1153 = vunpack.c.h.b16 %v893
    %v1154 = vunpack.c.l.b16 %v894
    %v1155 = vunpack.c.h.b16 %v894
    %v1156 = vunpack.c.l.b16 %v895
    %v1157 = vunpack.c.h.b16 %v895
    %v1158 = vunpack.c.l.b16 %v896
    %v1159 = vunpack.c.h.b16 %v896
    %v1160 = vunpack.c.l.b16 %v897
    %v1161 = vunpack.c.h.b16 %v897
    %v1162 = vunpack.c.l.b16 %v898
    %v1163 = vunpack.c.h.b16 %v898
    %v1164 = vunpack.c.l.b16 %v899
    %v1165 = vunpack.c.h.b16 %v899
    %v1166 = vunpack.c.l.b16 %v900
    %v1167 = vunpack.c.h.b16 %v900
    %v1168 = vunpack.c.l.b16 %v901
    %v1169 = vunpack.c.h.b16 %v901
    %v1170 = vunpack.c.l.b16 %v902
    %v1171 = vunpack.c.h.b16 %v902
    %v1172 = vunpack.c.l.b16 %v903
    %v1173 = vunpack.c.h.b16 %v903
    %v1174 = vunpack.c.l.b16 %v904
    %v1175 = vunpack.c.h.b16 %v904
    %v1176 = vunpack.c.l.b16 %v905
    %v1177 = vunpack.c.h.b16 %v905
    %v1178 = vunpack.c.l.b16 %v906
    %v1179 = vunpack.c.h.b16 %v906
    %v1180 = vunpack.c.l.b16 %v907
    %v1181 = vunpack.c.h.b16 %v907
    %v1182 = vunpack.c.l.b16 %v908
    %v1183 = vunpack.c.h.b16 %v908
    %v1184 = vunpack.c.l.b16 %v909
    %v1185 = vunpack.c.h.b16 %v909
    %v1186 = vunpack.c.l.b16 %v910
    %v1187 = vunpack.c.h.b16 %v910
    %v1188 = vunpack.c.l.b16 %v911
    %v1189 = vunpack.c.h.b16 %v911
    %v1190 = vunpack.c.l.b16 %v912
    %v1191 = vunpack.c.h.b16 %v912
    %v1192 = vunpack.c.l.b16 %v913
    %v1193 = vunpack.c.h.b16 %v913
    %v1194 = vunpack.c.l.b16 %v914
    %v1195 = vunpack.c.h.b16 %v914
    %v1196 = vunpack.c.l.b16 %v915
    %v1197 = vunpack.c.h.b16 %v915
    %v1198 = vunpack.c.l.b16 %v916
    %v1199 = vunpack.c.h.b16 %v916
    %v1200 = vunpack.c.l.b16 %v917
    %v1201 = vunpack.c.h.b16 %v917
    %v1202 = vunpack.c.l.b16 %v918
    %v1203 = vunpack.c.h.b16 %v918
    %v1204 = vunpack.c.l.b16 %v919
    %v1205 = vunpack.c.h.b16 %v919
    %v1206 = vunpack.c.l.b16 %v920
    %v1207 = vunpack.c.h.b16 %v920
    %v1208 = vunpack.c.l.b16 %v921
    %v1209 = vunpack.c.h.b16 %v921
    %v1210 = vunpack.c.l.b16 %v922
    %v1211 = vunpack.c.h.b16 %v922
    %v1212 = vunpack.c.l.b16 %v923
    %v1213 = vunpack.c.h.b16 %v923
    %v1214 = vunpack.c.l.b16 %v924
    %v1215 = vunpack.c.h.b16 %v924
    %v1216 = vunpack.c.l.b16 %v925
    %v1217 = vunpack.c.h.b16 %v925
    %v1218 = vunpack.c.l.b16 %v926
    %v1219 = vunpack.c.h.b16 %v926
    %v1220 = vunpack.c.l.b16 %v927
    %v1221 = vunpack.c.h.b16 %v927
    %v1222 = vunpack.c.l.b16 %v928
    %v1223 = vunpack.c.h.b16 %v928
    %v1224 = vunpack.c.l.b16 %v929
    %v1225 = vunpack.c.h.b16 %v929
    %v1226 = vunpack.c.l.b16 %v930
    %v1227 = vunpack.c.h.b16 %v930
    %v1228 = vunpack.c.l.b16 %v931
    %v1229 = vunpack.c.h.b16 %v931
    %v1230 = vunpack.c.l.b16 %v932
    %v1231 = vunpack.c.h.b16 %v932
    %v1232 = vunpack.c.l.b16 %v933
    %v1233 = vunpack.c.h.b16 %v933
    %v1234 = vunpack.c.l.b16 %v934
    %v1235 = vunpack.c.h.b16 %v934
    %v1236 = vunpack.c.l.b16 %v935
    %v1237 = vunpack.c.h.b16 %v935
    %v1238 = vunpack.c.l.b16 %v936
    %v1239 = vunpack.c.h.b16 %v936
    %v1240 = vunpack.c.l.b16 %v937
    %v1241 = vunpack.c.h.b16 %v937
    %v1242 = vunpack.c.l.b16 %v938
    %v1243 = vunpack.c.h.b16 %v938
    %v1244 = vunpack.c.l.b16 %v939
    %v1245 = vunpack.c.h.b16 %v939
    %v1246 = vunpack.c.l.b16 %v940
    %v1247 = vunpack.c.h.b16 %v940
    %v1248 = vunpack.c.l.b16 %v941
    %v1249 = vunpack.c.h.b16 %v941
    %v1250 = vunpack.c.l.b16 %v942
    %v1251 = vunpack.c.h.b16 %v942
    %v1252 = vunpack.c.l.b16 %v943
    %v1253 = vunpack.c.h.b16 %v943
    %v1254 = vunpack.c.l.b16 %v944
    %v1255 = vunpack.c.h.b16 %v944
    %v1256 = vunpack.c.l.b16 %v945
    %v1257 = vunpack.c.h.b16 %v945
    %v1258 = vunpack.c.l.b16 %v946
    %v1259 = vunpack.c.h.b16 %v946
    %v1260 = vunpack.c.l.b16 %v947
    %v1261 = vunpack.c.h.b16 %v947
    %v1262 = vunpack.c.l.b16 %v948
    %v1263 = vunpack.c.h.b16 %v948
    %v1264 = vunpack.c.l.b16 %v949
    %v1265 = vunpack.c.h.b16 %v949
    %v1266 = vunpack.c.l.b16 %v950
    %v1267 = vunpack.c.h.b16 %v950
    %v1268 = vunpack.c.l.b16 %v951
    %v1269 = vunpack.c.h.b16 %v951
    %v1270 = vunpack.c.l.b16 %v952
    %v1271 = vunpack.c.h.b16 %v952
    %v1272 = vunpack.c.l.b16 %v953
    %v1273 = vunpack.c.h.b16 %v953
    %v1274 = vunpack.c.l.b16 %v954
    %v1275 = vunpack.c.h.b16 %v954
    %v1276 = vunpack.c.l.b16 %v955
    %v1277 = vunpack.c.h.b16 %v955
    %v1278 = vpack.c.b16 %v1092, %v1086
    %v1279 = vpack.c.b16 %v1093, %v1087
    %v1280 = vpack.c.b16 %v1094, %v1088
    %v1281 = vpack.c.b16 %v1095, %v1089
    %v1282 = vpack.c.b16 %v1096, %v1090
    %v1283 = vpack.c.b16 %v1097, %v1091
    %v1284 = vpack.c.b16 %v1104, %v1098
    %v1285 = vpack.c.b16 %v1105, %v1099
    %v1286 = vpack.c.b16 %v1106, %v1100
    %v1287 = vpack.c.b16 %v1107, %v1101
    %v1288 = vpack.c.b16 %v1108, %v1102
    %v1289 = vpack.c.b16 %v1109, %v1103
    %v1290 = vpack.c.b16 %v1116, %v1110
    %v1291 = vpack.c.b16 %v1117, %v1111
    %v1292 = vpack.c.b16 %v1118, %v1112
    %v1293 = vpack.c.b16 %v1119, %v1113
    %v1294 = vpack.c.b16 %v1120, %v1114
    %v1295 = vpack.c.b16 %v1121, %v1115
    %v1296 = vpack.c.b16 %v1128, %v1122
    %v1297 = vpack.c.b16 %v1129, %v1123
    %v1298 = vpack.c.b16 %v1130, %v1124
    %v1299 = vpack.c.b16 %v1131, %v1125
    %v1300 = vpack.c.b16 %v1132, %v1126
    %v1301 = vpack.c.b16 %v1133, %v1127
    %v1302 = vpack.c.b16 %v1140, %v1134
    %v1303 = vpack.c.b16 %v1141, %v1135
    %v1304 = vpack.c.b16 %v1142, %v1136
    %v1305 = vpack.c.b16 %v1143, %v1137
    %v1306 = vpack.c.b16 %v1144, %v1138
    %v1307 = vpack.c.b16 %v1145, %v1139
    %v1308 = vpack.c.b16 %v1152, %v1146
    %v1309 = vpack.c.b16 %v1153, %v1147
    %v1310 = vpack.c.b16 %v1154, %v1148
    %v1311 = vpack.c.b16 %v1155, %v1149
    %v1312 = vpack.c.b16 %v1156, %v1150
    %v1313 = vpack.c.b16 %v1157, %v1151
    %v1314 = vpack.c.b16 %v1164, %v1158
    %v1315 = vpack.c.b16 %v1165, %v1159
    %v1316 = vpack.c.b16 %v1166, %v1160
    %v1317 = vpack.c.b16 %v1167, %v1161
    %v1318 = vpack.c.b16 %v1168, %v1162
    %v1319 = vpack.c.b16 %v1169, %v1163
    %v1320 = vpack.c.b16 %v1176, %v1170
    %v1321 = vpack.c.b16 %v1177, %v1171
    %v1322 = vpack.c.b16 %v1178, %v1172
    %v1323 = vpack.c.b16 %v1179, %v1173
    %v1324 = vpack.c.b16 %v1180, %v1174
    %v1325 = vpack.c.b16 %v1181, %v1175
    %v1326 = vpack.c.b16 %v1188, %v1182
    %v1327 = vpack.c.b16 %v1189, %v1183
    %v1328 = vpack.c.b16 %v1190, %v1184
    %v1329 = vpack.c.b16 %v1191, %v1185
    %v1330 = vpack.c.b16 %v1192, %v1186
    %v1331 = vpack.c.b16 %v1193, %v1187
    %v1332 = vpack.c.b16 %v1200, %v1194
    %v1333 = vpack.c.b16 %v1201, %v1195
    %v1334 = vpack.c.b16 %v1202, %v1196
    %v1335 = vpack.c.b16 %v1203, %v1197
    %v1336 = vpack.c.b16 %v1204, %v1198
    %v1337 = vpack.c.b16 %v1205, %v1199
    %v1338 = vpack.c.b16 %v1212, %v1206
    %v1339 = vpack.c.b16 %v1213, %v1207
    %v1340 = vpack.c.b16 %v1214, %v1208
    %v1341 = vpack.c.b16 %v1215, %v1209
    %v1342 = vpack.c.b16 %v1216, %v1210
    %v1343 = vpack.c.b16 %v1217, %v1211
    %v1344 = vpack.c.b16 %v1224, %v1218
    %v1345 = vpack.c.b16 %v1225, %v1219
    %v1346 = vpack.c.b16 %v1226, %v1220
    %v1347 = vpack.c.b16 %v1227, %v1221
    %v1348 = vpack.c.b16 %v1228, %v1222
    %v1349 = vpack.c.b16 %v1229, %v1223
    %v1350 = vpack.c.b16 %v1236, %v1230
    %v1351 = vpack.c.b16 %v1237, %v1231
    %v1352 = vpack.c.b16 %v1238, %v1232
    %v1353 = vpack.c.b16 %v1239, %v1233
    %v1354 = vpack.c.b16 %v1240, %v1234
    %v1355 = vpack.c.b16 %v1241, %v1235
    %v1356 = vpack.c.b16 %v1248, %v1242
    %v1357 = vpack.c.b16 %v1249, %v1243
    %v1358 = vpack.c.b16 %v1250, %v1244
    %v1359 = vpack.c.b16 %v1251, %v1245
    %v1360 = vpack.c.b16 %v1252, %v1246
    %v1361 = vpack.c.b16 %v1253, %v1247
    %v1362 = vpack.c.b16 %v1260, %v1254
    %v1363 = vpack.c.b16 %v1261, %v1255
    %v1364 = vpack.c.b16 %v1262, %v1256
    %v1365 = vpack.c.b16 %v1263, %v1257
    %v1366 = vpack.c.b16 %v1264, %v1258
    %v1367 = vpack.c.b16 %v1265, %v1259
    %v1368 = vpack.c.b16 %v1272, %v1266
    %v1369 = vpack.c.b16 %v1273, %v1267
    %v1370 = vpack.c.b16 %v1274, %v1268
    %v1371 = vpack.c.b16 %v1275, %v1269
    %v1372 = vpack.c.b16 %v1276, %v1270
    %v1373 = vpack.c.b16 %v1277, %v1271
    %1470 = vmatprep.subr.bf16.mxu0 %v1321
    %1471 = vmatpush1.bf16.msra.mxu0 %v1320
    %1472 = vmatprep.subr.bf16.mxu0 %v1315
    %1473 = vmatpush1.bf16.msra.mxu0 %v1314
    %1474 = vmatprep.subr.bf16.mxu0 %v1309
    %1475 = vmatpush1.bf16.msra.mxu0 %v1308
    %1476 = vmatprep.subr.bf16.mxu0 %v1303
    %1477 = vmatpush1.bf16.msra.mxu0 %v1302
    %1478 = vmatprep.subr.bf16.mxu0 %v1297
    %1479 = vmatpush1.bf16.msra.mxu0 %v1296
    %1480 = vmatprep.subr.bf16.mxu0 %v1291
    %1481 = vmatpush1.bf16.msra.mxu0 %v1290
    %1482 = vmatprep.subr.bf16.mxu0 %v1285
    %1483 = vmatpush1.bf16.msra.mxu0 %v1284
    %1484 = vmatprep.subr.bf16.mxu0 %v1279
    %1485 = vmatpush1.bf16.msra.mxu0 %v1278
    %1486 = vmatprep.subr.bf16.mxu0 %v1369
    %1487 = vmatpush2.bf16.msra.mxu0 %v1368
    %1488 = vmatprep.subr.bf16.mxu0 %v1363
    %1489 = vmatpush2.bf16.msra.mxu0 %v1362
    %1490 = vmatprep.subr.bf16.mxu0 %v1357
    %1491 = vmatpush2.bf16.msra.mxu0 %v1356
    %1492 = vmatprep.subr.bf16.mxu0 %v1351
    %1493 = vmatpush2.bf16.msra.mxu0 %v1350
    %1494 = vmatprep.subr.bf16.mxu0 %v1345
    %1495 = vmatpush2.bf16.msra.mxu0 %v1344
    %1496 = vmatprep.subr.bf16.mxu0 %v1339
    %1497 = vmatpush2.bf16.msra.mxu0 %v1338
    %1498 = vmatprep.subr.bf16.mxu0 %v1333
    %1499 = vmatpush2.bf16.msra.mxu0 %v1332
    %1500 = vmatprep.subr.bf16.mxu0 %v1327
    %1501 = vmatpush2.bf16.msra.mxu0 %v1326
    %1502 = vmatprep.mubr.bf16.mxu0 %v957
    %1503 = vmatmul.mubr.bf16.gmra.mxu0 %v956
    %v1504 = vpop.f32.mrf.mxu0
    %v1505 = vadd.f32 %v963, %v1504
    %v1506 = vpop.f32.mrf.mxu0
    %v1507 = vadd.f32 %v967, %v1506
    %v1508 = vpop.f32.mrf.mxu0
    %v1509 = vpop.f32.mrf.mxu0
    %1510 = vdwg.mxu0
    %1511 = vmatprep.subr.bf16.mxu0 %v1323
    %1512 = vmatpush1.bf16.msra.mxu0 %v1322
    %1513 = vmatprep.subr.bf16.mxu0 %v1317
    %1514 = vmatpush1.bf16.msra.mxu0 %v1316
    %1515 = vmatprep.subr.bf16.mxu0 %v1311
    %1516 = vmatpush1.bf16.msra.mxu0 %v1310
    %1517 = vmatprep.subr.bf16.mxu0 %v1305
    %1518 = vmatpush1.bf16.msra.mxu0 %v1304
    %1519 = vmatprep.subr.bf16.mxu0 %v1299
    %1520 = vmatpush1.bf16.msra.mxu0 %v1298
    %1521 = vmatprep.subr.bf16.mxu0 %v1293
    %1522 = vmatpush1.bf16.msra.mxu0 %v1292
    %1523 = vmatprep.subr.bf16.mxu0 %v1287
    %1524 = vmatpush1.bf16.msra.mxu0 %v1286
    %1525 = vmatprep.subr.bf16.mxu0 %v1281
    %1526 = vmatpush1.bf16.msra.mxu0 %v1280
    %1527 = vmatprep.subr.bf16.mxu0 %v1371
    %1528 = vmatpush2.bf16.msra.mxu0 %v1370
    %1529 = vmatprep.subr.bf16.mxu0 %v1365
    %1530 = vmatpush2.bf16.msra.mxu0 %v1364
    %1531 = vmatprep.subr.bf16.mxu0 %v1359
    %1532 = vmatpush2.bf16.msra.mxu0 %v1358
    %1533 = vmatprep.subr.bf16.mxu0 %v1353
    %1534 = vmatpush2.bf16.msra.mxu0 %v1352
    %1535 = vmatprep.subr.bf16.mxu0 %v1347
    %1536 = vmatpush2.bf16.msra.mxu0 %v1346
    %1537 = vmatprep.subr.bf16.mxu0 %v1341
    %1538 = vmatpush2.bf16.msra.mxu0 %v1340
    %1539 = vmatprep.subr.bf16.mxu0 %v1335
    %1540 = vmatpush2.bf16.msra.mxu0 %v1334
    %1541 = vmatprep.subr.bf16.mxu0 %v1329
    %1542 = vmatpush2.bf16.msra.mxu0 %v1328
    %1543 = vmatprep.mubr.bf16.mxu0 %v957
    %1544 = vmatmul.mubr.bf16.gmra.mxu0 %v956
    %v1545 = vpop.f32.mrf.mxu0
    %v1546 = vadd.f32 %v971, %v1545
    %v1547 = vpop.f32.mrf.mxu0
    %v1548 = vadd.f32 %v975, %v1547
    %v1549 = vpop.f32.mrf.mxu0
    %v1550 = vpop.f32.mrf.mxu0
    %1551 = vdwg.mxu0
    %1552 = vmatprep.subr.bf16.mxu0 %v1325
    %1553 = vmatpush1.bf16.msra.mxu0 %v1324
    %1554 = vmatprep.subr.bf16.mxu0 %v1319
    %1555 = vmatpush1.bf16.msra.mxu0 %v1318
    %1556 = vmatprep.subr.bf16.mxu0 %v1313
    %1557 = vmatpush1.bf16.msra.mxu0 %v1312
    %1558 = vmatprep.subr.bf16.mxu0 %v1307
    %1559 = vmatpush1.bf16.msra.mxu0 %v1306
    %1560 = vmatprep.subr.bf16.mxu0 %v1301
    %1561 = vmatpush1.bf16.msra.mxu0 %v1300
    %1562 = vmatprep.subr.bf16.mxu0 %v1295
    %1563 = vmatpush1.bf16.msra.mxu0 %v1294
    %1564 = vmatprep.subr.bf16.mxu0 %v1289
    %1565 = vmatpush1.bf16.msra.mxu0 %v1288
    %1566 = vmatprep.subr.bf16.mxu0 %v1283
    %1567 = vmatpush1.bf16.msra.mxu0 %v1282
    %1568 = vmatprep.subr.bf16.mxu0 %v1373
    %1569 = vmatpush2.bf16.msra.mxu0 %v1372
    %1570 = vmatprep.subr.bf16.mxu0 %v1367
    %1571 = vmatpush2.bf16.msra.mxu0 %v1366
    %1572 = vmatprep.subr.bf16.mxu0 %v1361
    %1573 = vmatpush2.bf16.msra.mxu0 %v1360
    %1574 = vmatprep.subr.bf16.mxu0 %v1355
    %1575 = vmatpush2.bf16.msra.mxu0 %v1354
    %1576 = vmatprep.subr.bf16.mxu0 %v1349
    %1577 = vmatpush2.bf16.msra.mxu0 %v1348
    %1578 = vmatprep.subr.bf16.mxu0 %v1343
    %1579 = vmatpush2.bf16.msra.mxu0 %v1342
    %1580 = vmatprep.subr.bf16.mxu0 %v1337
    %1581 = vmatpush2.bf16.msra.mxu0 %v1336
    %1582 = vmatprep.subr.bf16.mxu0 %v1331
    %1583 = vmatpush2.bf16.msra.mxu0 %v1330
    %1584 = vmatprep.mubr.bf16.mxu0 %v957
    %1585 = vmatmul.mubr.bf16.gmra.mxu0 %v956
    %v1586 = vpop.f32.mrf.mxu0
    %v1587 = vadd.f32 %v979, %v1586
    %v1588 = vpop.f32.mrf.mxu0
    %v1589 = vadd.f32 %v983, %v1588
    %v1590 = vpop.f32.mrf.mxu0
    %v1591 = vpop.f32.mrf.mxu0
    %1592 = vdwg.mxu0
    %v1593 = vpack.c.bf16 %v1505, %v1505
    %v1594 = vpack.c.bf16 %v1507, %v1507
    %v1595 = vpack.c.bf16 %v1546, %v1546
    %v1596 = vpack.c.bf16 %v1548, %v1548
    %1597 = vmatprep.subr.bf16.mxu0 0
    %1598 = vmatpush1.bf16.xpose.msra.mxu0 0
    %1599 = vmatprep.subr.bf16.mxu0 0
    %1600 = vmatpush1.bf16.xpose.msra.mxu0 0
    %1601 = vmatprep.subr.bf16.mxu0 0
    %1602 = vmatpush1.bf16.xpose.msra.mxu0 0
    %1603 = vmatprep.subr.bf16.mxu0 0
    %1604 = vmatpush1.bf16.xpose.msra.mxu0 0
    %1605 = vmatprep.subr.bf16.mxu0 0
    %1606 = vmatpush1.bf16.xpose.msra.mxu0 0
    %1607 = vmatprep.subr.bf16.mxu0 0
    %1608 = vmatpush1.bf16.xpose.msra.mxu0 0
    %1609 = vmatprep.subr.bf16.mxu0 0
    %1610 = vmatpush1.bf16.xpose.msra.mxu0 0
    %1611 = vmatprep.subr.bf16.mxu0 %v1596
    %1612 = vmatpush1.bf16.xpose.msra.mxu0 %v1595
    %1613 = vmatprep.subr.bf16.mxu0 0
    %1614 = vmatpush2.bf16.xpose.msra.mxu0 0
    %1615 = vmatprep.subr.bf16.mxu0 0
    %1616 = vmatpush2.bf16.xpose.msra.mxu0 0
    %1617 = vmatprep.subr.bf16.mxu0 0
    %1618 = vmatpush2.bf16.xpose.msra.mxu0 0
    %1619 = vmatprep.subr.bf16.mxu0 0
    %1620 = vmatpush2.bf16.xpose.msra.mxu0 0
    %1621 = vmatprep.subr.bf16.mxu0 0
    %1622 = vmatpush2.bf16.xpose.msra.mxu0 0
    %1623 = vmatprep.subr.bf16.mxu0 0
    %1624 = vmatpush2.bf16.xpose.msra.mxu0 0
    %1625 = vmatprep.subr.bf16.mxu0 0
    %1626 = vmatpush2.bf16.xpose.msra.mxu0 0
    %1627 = vmatprep.subr.bf16.mxu0 0
    %1628 = vmatpush2.bf16.xpose.msra.mxu0 0
    %1629 = vmatprep.mubr.bf16.mxu0 %v1594
    %1630 = vmatmul.mubr.bf16.gmra.mxu0 %v1593
    %v1631 = vpop.f32.mrf.mxu0
    %v1632 = vadd.f32 0.0, %v1631
    %v1633 = vpop.f32.mrf.mxu0
    %v1634 = vpop.f32.mrf.mxu0
    %v1635 = vpop.f32.mrf.mxu0
    %1636 = vdwg.mxu0
    %v1637 = vmul.f32 %v1632, 0.0625
    %vm1638 = vcmask 64512
    %v1639 = vsel %vm1638, %v1637, -inf
    %1640 = vmax.xlane.f32.xlu0 %v1639
    %v1641 = vpop.xlane.xlu0 %1640
    %v1642 = vsub.f32 %v1637, %v1641
    %v1643 = vmul.f32 %v1642, 1.442695
    %v1644 = vpow.pop %v1643
    %v1645 = vsel %vm1638, %v1644, 0.0
    %1646 = vadd.xlane.f32.xlu0 %v1645
    %v1647 = vpop.xlane.xlu0 %1646
    %v1648 = vrcp.pop %v1647
    %v1649 = vmul.f32 %v1644, %v1648
    %v1650 = vpack.c.bf16 %v1649, %v1649
    %v1651 = vpack.c.bf16 %v1587, %v1587
    %v1652 = vpack.c.bf16 %v1589, %v1589
    %v1654 = vsel %vm1638, %v1650, 0
    %vm1656 = vcmask 1043456
    %v1658 = vsel %vm1656, %v1651, 0
    %v1661 = vsel %vm1656, %v1652, 0
    %1663 = vmatprep.subr.bf16.mxu0 0
    %1664 = vmatpush1.bf16.msra.mxu0 0
    %1665 = vmatprep.subr.bf16.mxu0 0
    %1666 = vmatpush1.bf16.msra.mxu0 0
    %1667 = vmatprep.subr.bf16.mxu0 0
    %1668 = vmatpush1.bf16.msra.mxu0 0
    %1669 = vmatprep.subr.bf16.mxu0 0
    %1670 = vmatpush1.bf16.msra.mxu0 0
    %1671 = vmatprep.subr.bf16.mxu0 0
    %1672 = vmatpush1.bf16.msra.mxu0 0
    %1673 = vmatprep.subr.bf16.mxu0 0
    %1674 = vmatpush1.bf16.msra.mxu0 0
    %1675 = vmatprep.subr.bf16.mxu0 0
    %1676 = vmatpush1.bf16.msra.mxu0 0
    %1677 = vmatprep.subr.bf16.mxu0 %v1661
    %1678 = vmatpush1.bf16.msra.mxu0 %v1658
    %1679 = vmatprep.subr.bf16.mxu0 0
    %1680 = vmatpush2.bf16.msra.mxu0 0
    %1681 = vmatprep.subr.bf16.mxu0 0
    %1682 = vmatpush2.bf16.msra.mxu0 0
    %1683 = vmatprep.subr.bf16.mxu0 0
    %1684 = vmatpush2.bf16.msra.mxu0 0
    %1685 = vmatprep.subr.bf16.mxu0 0
    %1686 = vmatpush2.bf16.msra.mxu0 0
    %1687 = vmatprep.subr.bf16.mxu0 0
    %1688 = vmatpush2.bf16.msra.mxu0 0
    %1689 = vmatprep.subr.bf16.mxu0 0
    %1690 = vmatpush2.bf16.msra.mxu0 0
    %1691 = vmatprep.subr.bf16.mxu0 0
    %1692 = vmatpush2.bf16.msra.mxu0 0
    %1693 = vmatprep.subr.bf16.mxu0 0
    %1694 = vmatpush2.bf16.msra.mxu0 0
    %1695 = vmatprep.mubr.bf16.mxu0 0
    %1696 = vmatmul.mubr.bf16.gmra.mxu0 %v1654
    %v1697 = vpop.f32.mrf.mxu0
    %v1698 = vadd.f32 0.0, %v1697
    %v1699 = vpop.f32.mrf.mxu0
    %v1700 = vadd.f32 0.0, %v1699
    %v1701 = vpop.f32.mrf.mxu0
    %v1702 = vpop.f32.mrf.mxu0
    %1703 = vdwg.mxu0
    %s1704 = smul.u32 %s573, 4
    %s1705 = sshll.u32 %s1704, 4
    %1706 = dma.done %s61, %s1705
    %v1707 = vld [vmem:[#allocation3] sm:$0xff]
    %v1708 = vld [vmem:[#allocation3 + $0x10] sm:$0xff]
    %v1709 = vld [vmem:[#allocation3 + $0x20] sm:$0xff]
    %v1710 = vld [vmem:[#allocation3 + $0x30] sm:$0xff]
    %v1711 = vld [vmem:[#allocation3 + $0x40] sm:$0xff]
    %v1712 = vld [vmem:[#allocation3 + $0x50] sm:$0xff]
    %v1713 = vld [vmem:[#allocation3 + $0x60] sm:$0xff]
    %v1714 = vld [vmem:[#allocation3 + $0x70] sm:$0xff]
    %v1715 = vld [vmem:[#allocation3 + $0x80] sm:$0xff]
    %v1716 = vld [vmem:[#allocation3 + $0x90] sm:$0xff]
    %v1717 = vld [vmem:[#allocation3 + $0xa0] sm:$0xff]
    %v1718 = vld [vmem:[#allocation3 + $0xb0] sm:$0xff]
    %v1719 = vld [vmem:[#allocation3 + $0xc0] sm:$0xff]
    %v1720 = vld [vmem:[#allocation3 + $0xd0] sm:$0xff]
    %v1721 = vld [vmem:[#allocation3 + $0xe0] sm:$0xff]
    %v1722 = vld [vmem:[#allocation3 + $0xf0] sm:$0xff]
    %v1723 = vld [vmem:[#allocation3 + $0x100] sm:$0xff]
    %v1724 = vld [vmem:[#allocation3 + $0x110] sm:$0xff]
    %v1725 = vld [vmem:[#allocation3 + $0x120] sm:$0xff]
    %v1726 = vld [vmem:[#allocation3 + $0x130] sm:$0xff]
    %v1727 = vld [vmem:[#allocation3 + $0x140] sm:$0xff]
    %v1728 = vld [vmem:[#allocation3 + $0x150] sm:$0xff]
    %v1729 = vld [vmem:[#allocation3 + $0x160] sm:$0xff]
    %v1730 = vld [vmem:[#allocation3 + $0x170] sm:$0xff]
    %v1731 = vld [vmem:[#allocation3 + $0x180] sm:$0xff]
    %v1732 = vld [vmem:[#allocation3 + $0x190] sm:$0xff]
    %v1733 = vld [vmem:[#allocation3 + $0x1a0] sm:$0xff]
    %v1734 = vld [vmem:[#allocation3 + $0x1b0] sm:$0xff]
    %v1735 = vld [vmem:[#allocation3 + $0x1c0] sm:$0xff]
    %v1736 = vld [vmem:[#allocation3 + $0x1d0] sm:$0xff]
    %v1737 = vld [vmem:[#allocation3 + $0x1e0] sm:$0xff]
    %v1738 = vld [vmem:[#allocation3 + $0x1f0] sm:$0xff]
    %v1739 = vpack.c.bf16 %v1698, %v1698
    %v1740 = vpack.c.bf16 %v1700, %v1700
    %v1741 = vld [vmem:[#allocation6 + $0x10] sm:$0x3]
    %v1743 = vlaneseq
    %v1744 = vshrl.u32 %v1743, 7
    %v1745 = vsub.s32 0, %v1744
    %v1746 = vrot.slane %v1741, %v1745
    %v1747 = vlaneseq
    %v1748 = vshrl.u32 %v1747, 7
    %v1749 = vsub.s32 1, %v1748
    %v1750 = vrot.slane %v1741, %v1749
    %v1785 = vunpack.c.l.b16 %v1707
    %v1786 = vunpack.c.h.b16 %v1707
    %v1787 = vunpack.c.l.b16 %v1708
    %v1788 = vunpack.c.h.b16 %v1708
    %v1789 = vunpack.c.l.b16 %v1709
    %v1790 = vunpack.c.h.b16 %v1709
    %v1791 = vunpack.c.l.b16 %v1710
    %v1792 = vunpack.c.h.b16 %v1710
    %v1793 = vunpack.c.l.b16 %v1711
    %v1794 = vunpack.c.h.b16 %v1711
    %v1795 = vunpack.c.l.b16 %v1712
    %v1796 = vunpack.c.h.b16 %v1712
    %v1797 = vunpack.c.l.b16 %v1713
    %v1798 = vunpack.c.h.b16 %v1713
    %v1799 = vunpack.c.l.b16 %v1714
    %v1800 = vunpack.c.h.b16 %v1714
    %v1801 = vunpack.c.l.b16 %v1715
    %v1802 = vunpack.c.h.b16 %v1715
    %v1803 = vunpack.c.l.b16 %v1716
    %v1804 = vunpack.c.h.b16 %v1716
    %v1805 = vunpack.c.l.b16 %v1717
    %v1806 = vunpack.c.h.b16 %v1717
    %v1807 = vunpack.c.l.b16 %v1718
    %v1808 = vunpack.c.h.b16 %v1718
    %v1809 = vunpack.c.l.b16 %v1719
    %v1810 = vunpack.c.h.b16 %v1719
    %v1811 = vunpack.c.l.b16 %v1720
    %v1812 = vunpack.c.h.b16 %v1720
    %v1813 = vunpack.c.l.b16 %v1721
    %v1814 = vunpack.c.h.b16 %v1721
    %v1815 = vunpack.c.l.b16 %v1722
    %v1816 = vunpack.c.h.b16 %v1722
    %v1817 = vunpack.c.l.b16 %v1723
    %v1818 = vunpack.c.h.b16 %v1723
    %v1819 = vunpack.c.l.b16 %v1724
    %v1820 = vunpack.c.h.b16 %v1724
    %v1821 = vunpack.c.l.b16 %v1725
    %v1822 = vunpack.c.h.b16 %v1725
    %v1823 = vunpack.c.l.b16 %v1726
    %v1824 = vunpack.c.h.b16 %v1726
    %v1825 = vunpack.c.l.b16 %v1727
    %v1826 = vunpack.c.h.b16 %v1727
    %v1827 = vunpack.c.l.b16 %v1728
    %v1828 = vunpack.c.h.b16 %v1728
    %v1829 = vunpack.c.l.b16 %v1729
    %v1830 = vunpack.c.h.b16 %v1729
    %v1831 = vunpack.c.l.b16 %v1730
    %v1832 = vunpack.c.h.b16 %v1730
    %v1833 = vunpack.c.l.b16 %v1731
    %v1834 = vunpack.c.h.b16 %v1731
    %v1835 = vunpack.c.l.b16 %v1732
    %v1836 = vunpack.c.h.b16 %v1732
    %v1837 = vunpack.c.l.b16 %v1733
    %v1838 = vunpack.c.h.b16 %v1733
    %v1839 = vunpack.c.l.b16 %v1734
    %v1840 = vunpack.c.h.b16 %v1734
    %v1841 = vunpack.c.l.b16 %v1735
    %v1842 = vunpack.c.h.b16 %v1735
    %v1843 = vunpack.c.l.b16 %v1736
    %v1844 = vunpack.c.h.b16 %v1736
    %v1845 = vunpack.c.l.b16 %v1737
    %v1846 = vunpack.c.h.b16 %v1737
    %v1847 = vunpack.c.l.b16 %v1738
    %v1848 = vunpack.c.h.b16 %v1738
    %v1849 = vpack.c.b16 %v1787, %v1785
    %v1850 = vpack.c.b16 %v1788, %v1786
    %v1851 = vpack.c.b16 %v1791, %v1789
    %v1852 = vpack.c.b16 %v1792, %v1790
    %v1853 = vpack.c.b16 %v1795, %v1793
    %v1854 = vpack.c.b16 %v1796, %v1794
    %v1855 = vpack.c.b16 %v1799, %v1797
    %v1856 = vpack.c.b16 %v1800, %v1798
    %v1857 = vpack.c.b16 %v1803, %v1801
    %v1858 = vpack.c.b16 %v1804, %v1802
    %v1859 = vpack.c.b16 %v1807, %v1805
    %v1860 = vpack.c.b16 %v1808, %v1806
    %v1861 = vpack.c.b16 %v1811, %v1809
    %v1862 = vpack.c.b16 %v1812, %v1810
    %v1863 = vpack.c.b16 %v1815, %v1813
    %v1864 = vpack.c.b16 %v1816, %v1814
    %v1865 = vpack.c.b16 %v1819, %v1817
    %v1866 = vpack.c.b16 %v1820, %v1818
    %v1867 = vpack.c.b16 %v1823, %v1821
    %v1868 = vpack.c.b16 %v1824, %v1822
    %v1869 = vpack.c.b16 %v1827, %v1825
    %v1870 = vpack.c.b16 %v1828, %v1826
    %v1871 = vpack.c.b16 %v1831, %v1829
    %v1872 = vpack.c.b16 %v1832, %v1830
    %v1873 = vpack.c.b16 %v1835, %v1833
    %v1874 = vpack.c.b16 %v1836, %v1834
    %v1875 = vpack.c.b16 %v1839, %v1837
    %v1876 = vpack.c.b16 %v1840, %v1838
    %v1877 = vpack.c.b16 %v1843, %v1841
    %v1878 = vpack.c.b16 %v1844, %v1842
    %v1879 = vpack.c.b16 %v1847, %v1845
    %v1880 = vpack.c.b16 %v1848, %v1846
    %1913 = vmatprep.subr.bf16.mxu0 %v1864
    %1914 = vmatpush1.bf16.msra.mxu0 %v1863
    %1915 = vmatprep.subr.bf16.mxu0 %v1862
    %1916 = vmatpush1.bf16.msra.mxu0 %v1861
    %1917 = vmatprep.subr.bf16.mxu0 %v1860
    %1918 = vmatpush1.bf16.msra.mxu0 %v1859
    %1919 = vmatprep.subr.bf16.mxu0 %v1858
    %1920 = vmatpush1.bf16.msra.mxu0 %v1857
    %1921 = vmatprep.subr.bf16.mxu0 %v1856
    %1922 = vmatpush1.bf16.msra.mxu0 %v1855
    %1923 = vmatprep.subr.bf16.mxu0 %v1854
    %1924 = vmatpush1.bf16.msra.mxu0 %v1853
    %1925 = vmatprep.subr.bf16.mxu0 %v1852
    %1926 = vmatpush1.bf16.msra.mxu0 %v1851
    %1927 = vmatprep.subr.bf16.mxu0 %v1850
    %1928 = vmatpush1.bf16.msra.mxu0 %v1849
    %1929 = vmatprep.subr.bf16.mxu0 %v1880
    %1930 = vmatpush2.bf16.msra.mxu0 %v1879
    %1931 = vmatprep.subr.bf16.mxu0 %v1878
    %1932 = vmatpush2.bf16.msra.mxu0 %v1877
    %1933 = vmatprep.subr.bf16.mxu0 %v1876
    %1934 = vmatpush2.bf16.msra.mxu0 %v1875
    %1935 = vmatprep.subr.bf16.mxu0 %v1874
    %1936 = vmatpush2.bf16.msra.mxu0 %v1873
    %1937 = vmatprep.subr.bf16.mxu0 %v1872
    %1938 = vmatpush2.bf16.msra.mxu0 %v1871
    %1939 = vmatprep.subr.bf16.mxu0 %v1870
    %1940 = vmatpush2.bf16.msra.mxu0 %v1869
    %1941 = vmatprep.subr.bf16.mxu0 %v1868
    %1942 = vmatpush2.bf16.msra.mxu0 %v1867
    %1943 = vmatprep.subr.bf16.mxu0 %v1866
    %1944 = vmatpush2.bf16.msra.mxu0 %v1865
    %1945 = vmatprep.mubr.bf16.mxu0 %v1740
    %1946 = vmatmul.mubr.bf16.gmra.mxu0 %v1739
    %v1947 = vpop.f32.mrf.mxu0
    %v1948 = vadd.f32 %v1746, %v1947
    %v1949 = vpop.f32.mrf.mxu0
    %v1950 = vadd.f32 %v1750, %v1949
    %v1951 = vpop.f32.mrf.mxu0
    %v1952 = vpop.f32.mrf.mxu0
    %1953 = vdwg.mxu0
    %v1954 = vadd.f32 %v1948, %v858
    %v1955 = vadd.f32 %v1950, %v859
    %v1956 = vadd.f32 %v1954, %v1955
    %1957 = vadd.xlane.f32.xlu0 %v1956
    %v1958 = vpop.xlane.xlu0 %1957
    %v1959 = vrcp.pop 256.0
    %v1960 = vmul.f32 %v1958, %v1959
    %v1961 = vsub.f32 %v1954, %v1960
    %v1962 = vsub.f32 %v1955, %v1960
    %v1963 = vmul.f32 %v1961, %v1961
    %v1964 = vmul.f32 %v1962, %v1962
    %v1965 = vadd.f32 %v1963, %v1964
    %1966 = vadd.xlane.f32.xlu0 %v1965
    %v1967 = vpop.xlane.xlu0 %1966
    %v1968 = vmul.f32 %v1967, %v1959
    %v1969 = vadd.f32 %v1968, 1e-05
    %v1970 = vrsqrt.pop %v1969
    %v1971 = vmul.f32 %v1961, %v1970
    %v1972 = vmul.f32 %v1962, %v1970
    %v1973 = vld [vmem:[#allocation6 + $0x12] sm:$0x3]
    %v1975 = vlaneseq
    %v1976 = vshrl.u32 %v1975, 7
    %v1977 = vsub.s32 0, %v1976
    %v1978 = vrot.slane %v1973, %v1977
    %v1979 = vlaneseq
    %v1980 = vshrl.u32 %v1979, 7
    %v1981 = vsub.s32 1, %v1980
    %v1982 = vrot.slane %v1973, %v1981
    %v1985 = vmul.f32 %v1971, %v1978
    %v1986 = vmul.f32 %v1972, %v1982
    %v1987 = vld [vmem:[#allocation6 + $0x14] sm:$0x3]
    %v1989 = vlaneseq
    %v1990 = vshrl.u32 %v1989, 7
    %v1991 = vsub.s32 0, %v1990
    %v1992 = vrot.slane %v1987, %v1991
    %v1993 = vlaneseq
    %v1994 = vshrl.u32 %v1993, 7
    %v1995 = vsub.s32 1, %v1994
    %v1996 = vrot.slane %v1987, %v1995
    %v1999 = vadd.f32 %v1985, %v1992
    %v2000 = vadd.f32 %v1986, %v1996
    %v2001 = vld [vmem:[#allocation3 + $0x8] sm:$0xff]
    %v2002 = vld [vmem:[#allocation3 + $0x18] sm:$0xff]
    %v2003 = vld [vmem:[#allocation3 + $0x28] sm:$0xff]
    %v2004 = vld [vmem:[#allocation3 + $0x38] sm:$0xff]
    %v2005 = vld [vmem:[#allocation3 + $0x48] sm:$0xff]
    %v2006 = vld [vmem:[#allocation3 + $0x58] sm:$0xff]
    %v2007 = vld [vmem:[#allocation3 + $0x68] sm:$0xff]
    %v2008 = vld [vmem:[#allocation3 + $0x78] sm:$0xff]
    %v2009 = vld [vmem:[#allocation3 + $0x88] sm:$0xff]
    %v2010 = vld [vmem:[#allocation3 + $0x98] sm:$0xff]
    %v2011 = vld [vmem:[#allocation3 + $0xa8] sm:$0xff]
    %v2012 = vld [vmem:[#allocation3 + $0xb8] sm:$0xff]
    %v2013 = vld [vmem:[#allocation3 + $0xc8] sm:$0xff]
    %v2014 = vld [vmem:[#allocation3 + $0xd8] sm:$0xff]
    %v2015 = vld [vmem:[#allocation3 + $0xe8] sm:$0xff]
    %v2016 = vld [vmem:[#allocation3 + $0xf8] sm:$0xff]
    %v2017 = vld [vmem:[#allocation3 + $0x108] sm:$0xff]
    %v2018 = vld [vmem:[#allocation3 + $0x118] sm:$0xff]
    %v2019 = vld [vmem:[#allocation3 + $0x128] sm:$0xff]
    %v2020 = vld [vmem:[#allocation3 + $0x138] sm:$0xff]
    %v2021 = vld [vmem:[#allocation3 + $0x148] sm:$0xff]
    %v2022 = vld [vmem:[#allocation3 + $0x158] sm:$0xff]
    %v2023 = vld [vmem:[#allocation3 + $0x168] sm:$0xff]
    %v2024 = vld [vmem:[#allocation3 + $0x178] sm:$0xff]
    %v2025 = vld [vmem:[#allocation3 + $0x188] sm:$0xff]
    %v2026 = vld [vmem:[#allocation3 + $0x198] sm:$0xff]
    %v2027 = vld [vmem:[#allocation3 + $0x1a8] sm:$0xff]
    %v2028 = vld [vmem:[#allocation3 + $0x1b8] sm:$0xff]
    %v2029 = vld [vmem:[#allocation3 + $0x1c8] sm:$0xff]
    %v2030 = vld [vmem:[#allocation3 + $0x1d8] sm:$0xff]
    %v2031 = vld [vmem:[#allocation3 + $0x1e8] sm:$0xff]
    %v2032 = vld [vmem:[#allocation3 + $0x1f8] sm:$0xff]
    %v2033 = vpack.c.bf16 %v523, %v523
    %v2034 = vpack.c.bf16 %v524, %v524
    %v2035 = vld [vmem:[#allocation6 + $0x4] sm:$0x3]
    %v2037 = vlaneseq
    %v2038 = vshrl.u32 %v2037, 7
    %v2039 = vsub.s32 0, %v2038
    %v2040 = vrot.slane %v2035, %v2039
    %v2041 = vlaneseq
    %v2042 = vshrl.u32 %v2041, 7
    %v2043 = vsub.s32 1, %v2042
    %v2044 = vrot.slane %v2035, %v2043
    %v2079 = vunpack.c.l.b16 %v2001
    %v2080 = vunpack.c.h.b16 %v2001
    %v2081 = vunpack.c.l.b16 %v2002
    %v2082 = vunpack.c.h.b16 %v2002
    %v2083 = vunpack.c.l.b16 %v2003
    %v2084 = vunpack.c.h.b16 %v2003
    %v2085 = vunpack.c.l.b16 %v2004
    %v2086 = vunpack.c.h.b16 %v2004
    %v2087 = vunpack.c.l.b16 %v2005
    %v2088 = vunpack.c.h.b16 %v2005
    %v2089 = vunpack.c.l.b16 %v2006
    %v2090 = vunpack.c.h.b16 %v2006
    %v2091 = vunpack.c.l.b16 %v2007
    %v2092 = vunpack.c.h.b16 %v2007
    %v2093 = vunpack.c.l.b16 %v2008
    %v2094 = vunpack.c.h.b16 %v2008
    %v2095 = vunpack.c.l.b16 %v2009
    %v2096 = vunpack.c.h.b16 %v2009
    %v2097 = vunpack.c.l.b16 %v2010
    %v2098 = vunpack.c.h.b16 %v2010
    %v2099 = vunpack.c.l.b16 %v2011
    %v2100 = vunpack.c.h.b16 %v2011
    %v2101 = vunpack.c.l.b16 %v2012
    %v2102 = vunpack.c.h.b16 %v2012
    %v2103 = vunpack.c.l.b16 %v2013
    %v2104 = vunpack.c.h.b16 %v2013
    %v2105 = vunpack.c.l.b16 %v2014
    %v2106 = vunpack.c.h.b16 %v2014
    %v2107 = vunpack.c.l.b16 %v2015
    %v2108 = vunpack.c.h.b16 %v2015
    %v2109 = vunpack.c.l.b16 %v2016
    %v2110 = vunpack.c.h.b16 %v2016
    %v2111 = vunpack.c.l.b16 %v2017
    %v2112 = vunpack.c.h.b16 %v2017
    %v2113 = vunpack.c.l.b16 %v2018
    %v2114 = vunpack.c.h.b16 %v2018
    %v2115 = vunpack.c.l.b16 %v2019
    %v2116 = vunpack.c.h.b16 %v2019
    %v2117 = vunpack.c.l.b16 %v2020
    %v2118 = vunpack.c.h.b16 %v2020
    %v2119 = vunpack.c.l.b16 %v2021
    %v2120 = vunpack.c.h.b16 %v2021
    %v2121 = vunpack.c.l.b16 %v2022
    %v2122 = vunpack.c.h.b16 %v2022
    %v2123 = vunpack.c.l.b16 %v2023
    %v2124 = vunpack.c.h.b16 %v2023
    %v2125 = vunpack.c.l.b16 %v2024
    %v2126 = vunpack.c.h.b16 %v2024
    %v2127 = vunpack.c.l.b16 %v2025
    %v2128 = vunpack.c.h.b16 %v2025
    %v2129 = vunpack.c.l.b16 %v2026
    %v2130 = vunpack.c.h.b16 %v2026
    %v2131 = vunpack.c.l.b16 %v2027
    %v2132 = vunpack.c.h.b16 %v2027
    %v2133 = vunpack.c.l.b16 %v2028
    %v2134 = vunpack.c.h.b16 %v2028
    %v2135 = vunpack.c.l.b16 %v2029
    %v2136 = vunpack.c.h.b16 %v2029
    %v2137 = vunpack.c.l.b16 %v2030
    %v2138 = vunpack.c.h.b16 %v2030
    %v2139 = vunpack.c.l.b16 %v2031
    %v2140 = vunpack.c.h.b16 %v2031
    %v2141 = vunpack.c.l.b16 %v2032
    %v2142 = vunpack.c.h.b16 %v2032
    %v2143 = vpack.c.b16 %v2081, %v2079
    %v2144 = vpack.c.b16 %v2082, %v2080
    %v2145 = vpack.c.b16 %v2085, %v2083
    %v2146 = vpack.c.b16 %v2086, %v2084
    %v2147 = vpack.c.b16 %v2089, %v2087
    %v2148 = vpack.c.b16 %v2090, %v2088
    %v2149 = vpack.c.b16 %v2093, %v2091
    %v2150 = vpack.c.b16 %v2094, %v2092
    %v2151 = vpack.c.b16 %v2097, %v2095
    %v2152 = vpack.c.b16 %v2098, %v2096
    %v2153 = vpack.c.b16 %v2101, %v2099
    %v2154 = vpack.c.b16 %v2102, %v2100
    %v2155 = vpack.c.b16 %v2105, %v2103
    %v2156 = vpack.c.b16 %v2106, %v2104
    %v2157 = vpack.c.b16 %v2109, %v2107
    %v2158 = vpack.c.b16 %v2110, %v2108
    %v2159 = vpack.c.b16 %v2113, %v2111
    %v2160 = vpack.c.b16 %v2114, %v2112
    %v2161 = vpack.c.b16 %v2117, %v2115
    %v2162 = vpack.c.b16 %v2118, %v2116
    %v2163 = vpack.c.b16 %v2121, %v2119
    %v2164 = vpack.c.b16 %v2122, %v2120
    %v2165 = vpack.c.b16 %v2125, %v2123
    %v2166 = vpack.c.b16 %v2126, %v2124
    %v2167 = vpack.c.b16 %v2129, %v2127
    %v2168 = vpack.c.b16 %v2130, %v2128
    %v2169 = vpack.c.b16 %v2133, %v2131
    %v2170 = vpack.c.b16 %v2134, %v2132
    %v2171 = vpack.c.b16 %v2137, %v2135
    %v2172 = vpack.c.b16 %v2138, %v2136
    %v2173 = vpack.c.b16 %v2141, %v2139
    %v2174 = vpack.c.b16 %v2142, %v2140
    %2207 = vmatprep.subr.bf16.mxu0 %v2158
    %2208 = vmatpush1.bf16.msra.mxu0 %v2157
    %2209 = vmatprep.subr.bf16.mxu0 %v2156
    %2210 = vmatpush1.bf16.msra.mxu0 %v2155
    %2211 = vmatprep.subr.bf16.mxu0 %v2154
    %2212 = vmatpush1.bf16.msra.mxu0 %v2153
    %2213 = vmatprep.subr.bf16.mxu0 %v2152
    %2214 = vmatpush1.bf16.msra.mxu0 %v2151
    %2215 = vmatprep.subr.bf16.mxu0 %v2150
    %2216 = vmatpush1.bf16.msra.mxu0 %v2149
    %2217 = vmatprep.subr.bf16.mxu0 %v2148
    %2218 = vmatpush1.bf16.msra.mxu0 %v2147
    %2219 = vmatprep.subr.bf16.mxu0 %v2146
    %2220 = vmatpush1.bf16.msra.mxu0 %v2145
    %2221 = vmatprep.subr.bf16.mxu0 %v2144
    %2222 = vmatpush1.bf16.msra.mxu0 %v2143
    %2223 = vmatprep.subr.bf16.mxu0 %v2174
    %2224 = vmatpush2.bf16.msra.mxu0 %v2173
    %2225 = vmatprep.subr.bf16.mxu0 %v2172
    %2226 = vmatpush2.bf16.msra.mxu0 %v2171
    %2227 = vmatprep.subr.bf16.mxu0 %v2170
    %2228 = vmatpush2.bf16.msra.mxu0 %v2169
    %2229 = vmatprep.subr.bf16.mxu0 %v2168
    %2230 = vmatpush2.bf16.msra.mxu0 %v2167
    %2231 = vmatprep.subr.bf16.mxu0 %v2166
    %2232 = vmatpush2.bf16.msra.mxu0 %v2165
    %2233 = vmatprep.subr.bf16.mxu0 %v2164
    %2234 = vmatpush2.bf16.msra.mxu0 %v2163
    %2235 = vmatprep.subr.bf16.mxu0 %v2162
    %2236 = vmatpush2.bf16.msra.mxu0 %v2161
    %2237 = vmatprep.subr.bf16.mxu0 %v2160
    %2238 = vmatpush2.bf16.msra.mxu0 %v2159
    %2239 = vmatprep.mubr.bf16.mxu0 %v2034
    %2240 = vmatmul.mubr.bf16.gmra.mxu0 %v2033
    %v2241 = vpop.f32.mrf.mxu0
    %v2242 = vadd.f32 %v2040, %v2241
    %v2243 = vpop.f32.mrf.mxu0
    %v2244 = vadd.f32 %v2044, %v2243
    %v2245 = vpop.f32.mrf.mxu0
    %v2246 = vpop.f32.mrf.mxu0
    %2247 = vdwg.mxu0
    %v2248 = vmax.f32 %v2242, 0.0
    %v2249 = vmax.f32 %v2244, 0.0
    %v2250 = vand.u32 2147483647, %v2242
    %v2251 = vand.u32 2147483647, %v2244
    %v2252 = vsub.f32 0.0, %v2250
    %v2253 = vsub.f32 0.0, %v2251
    %v2254 = vmul.f32 %v2252, 1.442695
    %v2255 = vpow.pop %v2254
    %v2256 = vmul.f32 %v2253, 1.442695
    %v2257 = vpow.pop %v2256
    %v2258 = vadd.f32 %v2255, 1.0
    %v2259 = vlog2.pop %v2258
    %v2260 = vmul.f32 %v2259, 0.6931472
    %v2261 = vmul.f32 -0.5, %v2255
    %v2262 = vadd.f32 %v2261, 1.0
    %v2263 = vmul.f32 %v2262, %v2255
    %v2264 = vand.u32 2147483647, %v2255
    %vm2265 = vcmp.lt.f32.partialorder %v2264, 0.0004427343
    %v2266 = vsel %vm2265, %v2263, %v2260
    %v2267 = vadd.f32 %v2257, 1.0
    %v2268 = vlog2.pop %v2267
    %v2269 = vmul.f32 %v2268, 0.6931472
    %v2270 = vmul.f32 -0.5, %v2257
    %v2271 = vadd.f32 %v2270, 1.0
    %v2272 = vmul.f32 %v2271, %v2257
    %v2273 = vand.u32 2147483647, %v2257
    %vm2274 = vcmp.lt.f32.partialorder %v2273, 0.0004427343
    %v2275 = vsel %vm2274, %v2272, %v2269
    %v2276 = vadd.f32 %v2248, %v2266
    %v2277 = vadd.f32 %v2249, %v2275
    %v2278 = vtanh.pop %v2276
    %v2279 = vtanh.pop %v2277
    %v2280 = vmul.f32 %v2242, %v2278
    %v2281 = vmul.f32 %v2244, %v2279
    %v2282 = vadd.f32 %v1999, %v2280
    %v2283 = vadd.f32 %v2000, %v2281
    %s2284 = smul.u32 %s573, 3
    %s2285 = sshll.u32 %s2284, 4
    %2286 = dma.done %s73, %s2285
    %v2287 = vld [vmem:[#allocation4] sm:$0xff]
    %v2288 = vld [vmem:[#allocation4 + $0xc] sm:$0xff]
    %v2289 = vld [vmem:[#allocation4 + $0x18] sm:$0xff]
    %v2290 = vld [vmem:[#allocation4 + $0x24] sm:$0xff]
    %v2291 = vld [vmem:[#allocation4 + $0x30] sm:$0xff]
    %v2292 = vld [vmem:[#allocation4 + $0x3c] sm:$0xff]
    %v2293 = vld [vmem:[#allocation4 + $0x48] sm:$0xff]
    %v2294 = vld [vmem:[#allocation4 + $0x54] sm:$0xff]
    %v2295 = vld [vmem:[#allocation4 + $0x60] sm:$0xff]
    %v2296 = vld [vmem:[#allocation4 + $0x6c] sm:$0xff]
    %v2297 = vld [vmem:[#allocation4 + $0x78] sm:$0xff]
    %v2298 = vld [vmem:[#allocation4 + $0x84] sm:$0xff]
    %v2299 = vld [vmem:[#allocation4 + $0x90] sm:$0xff]
    %v2300 = vld [vmem:[#allocation4 + $0x9c] sm:$0xff]
    %v2301 = vld [vmem:[#allocation4 + $0xa8] sm:$0xff]
    %v2302 = vld [vmem:[#allocation4 + $0xb4] sm:$0xff]
    %v2303 = vld [vmem:[#allocation4 + $0xc0] sm:$0xff]
    %v2304 = vld [vmem:[#allocation4 + $0xcc] sm:$0xff]
    %v2305 = vld [vmem:[#allocation4 + $0xd8] sm:$0xff]
    %v2306 = vld [vmem:[#allocation4 + $0xe4] sm:$0xff]
    %v2307 = vld [vmem:[#allocation4 + $0xf0] sm:$0xff]
    %v2308 = vld [vmem:[#allocation4 + $0xfc] sm:$0xff]
    %v2309 = vld [vmem:[#allocation4 + $0x108] sm:$0xff]
    %v2310 = vld [vmem:[#allocation4 + $0x114] sm:$0xff]
    %v2311 = vld [vmem:[#allocation4 + $0x120] sm:$0xff]
    %v2312 = vld [vmem:[#allocation4 + $0x12c] sm:$0xff]
    %v2313 = vld [vmem:[#allocation4 + $0x138] sm:$0xff]
    %v2314 = vld [vmem:[#allocation4 + $0x144] sm:$0xff]
    %v2315 = vld [vmem:[#allocation4 + $0x150] sm:$0xff]
    %v2316 = vld [vmem:[#allocation4 + $0x15c] sm:$0xff]
    %v2317 = vld [vmem:[#allocation4 + $0x168] sm:$0xff]
    %v2318 = vld [vmem:[#allocation4 + $0x174] sm:$0xff]
    %v2319 = vpack.c.bf16 %v2282, %v2282
    %v2320 = vpack.c.bf16 %v2283, %v2283
    %v2321 = vld [vmem:[#allocation6 + $0x16] sm:$0x3]
    %v2323 = vlaneseq
    %v2324 = vshrl.u32 %v2323, 7
    %v2325 = vsub.s32 0, %v2324
    %v2326 = vrot.slane %v2321, %v2325
    %v2327 = vlaneseq
    %v2328 = vshrl.u32 %v2327, 7
    %v2329 = vsub.s32 1, %v2328
    %v2330 = vrot.slane %v2321, %v2329
    %v2365 = vunpack.c.l.b16 %v2287
    %v2366 = vunpack.c.h.b16 %v2287
    %v2367 = vunpack.c.l.b16 %v2288
    %v2368 = vunpack.c.h.b16 %v2288
    %v2369 = vunpack.c.l.b16 %v2289
    %v2370 = vunpack.c.h.b16 %v2289
    %v2371 = vunpack.c.l.b16 %v2290
    %v2372 = vunpack.c.h.b16 %v2290
    %v2373 = vunpack.c.l.b16 %v2291
    %v2374 = vunpack.c.h.b16 %v2291
    %v2375 = vunpack.c.l.b16 %v2292
    %v2376 = vunpack.c.h.b16 %v2292
    %v2377 = vunpack.c.l.b16 %v2293
    %v2378 = vunpack.c.h.b16 %v2293
    %v2379 = vunpack.c.l.b16 %v2294
    %v2380 = vunpack.c.h.b16 %v2294
    %v2381 = vunpack.c.l.b16 %v2295
    %v2382 = vunpack.c.h.b16 %v2295
    %v2383 = vunpack.c.l.b16 %v2296
    %v2384 = vunpack.c.h.b16 %v2296
    %v2385 = vunpack.c.l.b16 %v2297
    %v2386 = vunpack.c.h.b16 %v2297
    %v2387 = vunpack.c.l.b16 %v2298
    %v2388 = vunpack.c.h.b16 %v2298
    %v2389 = vunpack.c.l.b16 %v2299
    %v2390 = vunpack.c.h.b16 %v2299
    %v2391 = vunpack.c.l.b16 %v2300
    %v2392 = vunpack.c.h.b16 %v2300
    %v2393 = vunpack.c.l.b16 %v2301
    %v2394 = vunpack.c.h.b16 %v2301
    %v2395 = vunpack.c.l.b16 %v2302
    %v2396 = vunpack.c.h.b16 %v2302
    %v2397 = vunpack.c.l.b16 %v2303
    %v2398 = vunpack.c.h.b16 %v2303
    %v2399 = vunpack.c.l.b16 %v2304
    %v2400 = vunpack.c.h.b16 %v2304
    %v2401 = vunpack.c.l.b16 %v2305
    %v2402 = vunpack.c.h.b16 %v2305
    %v2403 = vunpack.c.l.b16 %v2306
    %v2404 = vunpack.c.h.b16 %v2306
    %v2405 = vunpack.c.l.b16 %v2307
    %v2406 = vunpack.c.h.b16 %v2307
    %v2407 = vunpack.c.l.b16 %v2308
    %v2408 = vunpack.c.h.b16 %v2308
    %v2409 = vunpack.c.l.b16 %v2309
    %v2410 = vunpack.c.h.b16 %v2309
    %v2411 = vunpack.c.l.b16 %v2310
    %v2412 = vunpack.c.h.b16 %v2310
    %v2413 = vunpack.c.l.b16 %v2311
    %v2414 = vunpack.c.h.b16 %v2311
    %v2415 = vunpack.c.l.b16 %v2312
    %v2416 = vunpack.c.h.b16 %v2312
    %v2417 = vunpack.c.l.b16 %v2313
    %v2418 = vunpack.c.h.b16 %v2313
    %v2419 = vunpack.c.l.b16 %v2314
    %v2420 = vunpack.c.h.b16 %v2314
    %v2421 = vunpack.c.l.b16 %v2315
    %v2422 = vunpack.c.h.b16 %v2315
    %v2423 = vunpack.c.l.b16 %v2316
    %v2424 = vunpack.c.h.b16 %v2316
    %v2425 = vunpack.c.l.b16 %v2317
    %v2426 = vunpack.c.h.b16 %v2317
    %v2427 = vunpack.c.l.b16 %v2318
    %v2428 = vunpack.c.h.b16 %v2318
    %v2429 = vpack.c.b16 %v2367, %v2365
    %v2430 = vpack.c.b16 %v2368, %v2366
    %v2431 = vpack.c.b16 %v2371, %v2369
    %v2432 = vpack.c.b16 %v2372, %v2370
    %v2433 = vpack.c.b16 %v2375, %v2373
    %v2434 = vpack.c.b16 %v2376, %v2374
    %v2435 = vpack.c.b16 %v2379, %v2377
    %v2436 = vpack.c.b16 %v2380, %v2378
    %v2437 = vpack.c.b16 %v2383, %v2381
    %v2438 = vpack.c.b16 %v2384, %v2382
    %v2439 = vpack.c.b16 %v2387, %v2385
    %v2440 = vpack.c.b16 %v2388, %v2386
    %v2441 = vpack.c.b16 %v2391, %v2389
    %v2442 = vpack.c.b16 %v2392, %v2390
    %v2443 = vpack.c.b16 %v2395, %v2393
    %v2444 = vpack.c.b16 %v2396, %v2394
    %v2445 = vpack.c.b16 %v2399, %v2397
    %v2446 = vpack.c.b16 %v2400, %v2398
    %v2447 = vpack.c.b16 %v2403, %v2401
    %v2448 = vpack.c.b16 %v2404, %v2402
    %v2449 = vpack.c.b16 %v2407, %v2405
    %v2450 = vpack.c.b16 %v2408, %v2406
    %v2451 = vpack.c.b16 %v2411, %v2409
    %v2452 = vpack.c.b16 %v2412, %v2410
    %v2453 = vpack.c.b16 %v2415, %v2413
    %v2454 = vpack.c.b16 %v2416, %v2414
    %v2455 = vpack.c.b16 %v2419, %v2417
    %v2456 = vpack.c.b16 %v2420, %v2418
    %v2457 = vpack.c.b16 %v2423, %v2421
    %v2458 = vpack.c.b16 %v2424, %v2422
    %v2459 = vpack.c.b16 %v2427, %v2425
    %v2460 = vpack.c.b16 %v2428, %v2426
    %2493 = vmatprep.subr.bf16.mxu0 %v2444
    %2494 = vmatpush1.bf16.msra.mxu0 %v2443
    %2495 = vmatprep.subr.bf16.mxu0 %v2442
    %2496 = vmatpush1.bf16.msra.mxu0 %v2441
    %2497 = vmatprep.subr.bf16.mxu0 %v2440
    %2498 = vmatpush1.bf16.msra.mxu0 %v2439
    %2499 = vmatprep.subr.bf16.mxu0 %v2438
    %2500 = vmatpush1.bf16.msra.mxu0 %v2437
    %2501 = vmatprep.subr.bf16.mxu0 %v2436
    %2502 = vmatpush1.bf16.msra.mxu0 %v2435
    %2503 = vmatprep.subr.bf16.mxu0 %v2434
    %2504 = vmatpush1.bf16.msra.mxu0 %v2433
    %2505 = vmatprep.subr.bf16.mxu0 %v2432
    %2506 = vmatpush1.bf16.msra.mxu0 %v2431
    %2507 = vmatprep.subr.bf16.mxu0 %v2430
    %2508 = vmatpush1.bf16.msra.mxu0 %v2429
    %2509 = vmatprep.subr.bf16.mxu0 %v2460
    %2510 = vmatpush2.bf16.msra.mxu0 %v2459
    %2511 = vmatprep.subr.bf16.mxu0 %v2458
    %2512 = vmatpush2.bf16.msra.mxu0 %v2457
    %2513 = vmatprep.subr.bf16.mxu0 %v2456
    %2514 = vmatpush2.bf16.msra.mxu0 %v2455
    %2515 = vmatprep.subr.bf16.mxu0 %v2454
    %2516 = vmatpush2.bf16.msra.mxu0 %v2453
    %2517 = vmatprep.subr.bf16.mxu0 %v2452
    %2518 = vmatpush2.bf16.msra.mxu0 %v2451
    %2519 = vmatprep.subr.bf16.mxu0 %v2450
    %2520 = vmatpush2.bf16.msra.mxu0 %v2449
    %2521 = vmatprep.subr.bf16.mxu0 %v2448
    %2522 = vmatpush2.bf16.msra.mxu0 %v2447
    %2523 = vmatprep.subr.bf16.mxu0 %v2446
    %2524 = vmatpush2.bf16.msra.mxu0 %v2445
    %2525 = vmatprep.mubr.bf16.mxu0 %v2320
    %2526 = vmatmul.mubr.bf16.gmra.mxu0 %v2319
    %v2527 = vpop.f32.mrf.mxu0
    %v2528 = vadd.f32 %v2326, %v2527
    %v2529 = vpop.f32.mrf.mxu0
    %v2530 = vadd.f32 %v2330, %v2529
    %v2531 = vpop.f32.mrf.mxu0
    %v2532 = vpop.f32.mrf.mxu0
    %2533 = vdwg.mxu0
    %v2534 = vmax.f32 %v2528, 0.0
    %v2535 = vmax.f32 %v2530, 0.0
    %v2536 = vand.u32 2147483647, %v2528
    %v2537 = vand.u32 2147483647, %v2530
    %v2538 = vsub.f32 0.0, %v2536
    %v2539 = vsub.f32 0.0, %v2537
    %v2540 = vmul.f32 %v2538, 1.442695
    %v2541 = vpow.pop %v2540
    %v2542 = vmul.f32 %v2539, 1.442695
    %v2543 = vpow.pop %v2542
    %v2544 = vadd.f32 %v2541, 1.0
    %v2545 = vlog2.pop %v2544
    %v2546 = vmul.f32 %v2545, 0.6931472
    %v2547 = vmul.f32 -0.5, %v2541
    %v2548 = vadd.f32 %v2547, 1.0
    %v2549 = vmul.f32 %v2548, %v2541
    %v2550 = vand.u32 2147483647, %v2541
    %vm2551 = vcmp.lt.f32.partialorder %v2550, 0.0004427343
    %v2552 = vsel %vm2551, %v2549, %v2546
    %v2553 = vadd.f32 %v2543, 1.0
    %v2554 = vlog2.pop %v2553
    %v2555 = vmul.f32 %v2554, 0.6931472
    %v2556 = vmul.f32 -0.5, %v2543
    %v2557 = vadd.f32 %v2556, 1.0
    %v2558 = vmul.f32 %v2557, %v2543
    %v2559 = vand.u32 2147483647, %v2543
    %vm2560 = vcmp.lt.f32.partialorder %v2559, 0.0004427343
    %v2561 = vsel %vm2560, %v2558, %v2555
    %v2562 = vadd.f32 %v2534, %v2552
    %v2563 = vadd.f32 %v2535, %v2561
    %v2564 = vtanh.pop %v2562
    %v2565 = vtanh.pop %v2563
    %v2566 = vmul.f32 %v2528, %v2564
    %v2567 = vmul.f32 %v2530, %v2565
    %v2568 = vld [vmem:[#allocation4 + $0x8] sm:$0xf]
    %v2569 = vld [vmem:[#allocation4 + $0x14] sm:$0xf]
    %v2570 = vld [vmem:[#allocation4 + $0x20] sm:$0xf]
    %v2571 = vld [vmem:[#allocation4 + $0x2c] sm:$0xf]
    %v2572 = vld [vmem:[#allocation4 + $0x38] sm:$0xf]
    %v2573 = vld [vmem:[#allocation4 + $0x44] sm:$0xf]
    %v2574 = vld [vmem:[#allocation4 + $0x50] sm:$0xf]
    %v2575 = vld [vmem:[#allocation4 + $0x5c] sm:$0xf]
    %v2576 = vld [vmem:[#allocation4 + $0x68] sm:$0xf]
    %v2577 = vld [vmem:[#allocation4 + $0x74] sm:$0xf]
    %v2578 = vld [vmem:[#allocation4 + $0x80] sm:$0xf]
    %v2579 = vld [vmem:[#allocation4 + $0x8c] sm:$0xf]
    %v2580 = vld [vmem:[#allocation4 + $0x98] sm:$0xf]
    %v2581 = vld [vmem:[#allocation4 + $0xa4] sm:$0xf]
    %v2582 = vld [vmem:[#allocation4 + $0xb0] sm:$0xf]
    %v2583 = vld [vmem:[#allocation4 + $0xbc] sm:$0xf]
    %v2584 = vld [vmem:[#allocation4 + $0xc8] sm:$0xf]
    %v2585 = vld [vmem:[#allocation4 + $0xd4] sm:$0xf]
    %v2586 = vld [vmem:[#allocation4 + $0xe0] sm:$0xf]
    %v2587 = vld [vmem:[#allocation4 + $0xec] sm:$0xf]
    %v2588 = vld [vmem:[#allocation4 + $0xf8] sm:$0xf]
    %v2589 = vld [vmem:[#allocation4 + $0x104] sm:$0xf]
    %v2590 = vld [vmem:[#allocation4 + $0x110] sm:$0xf]
    %v2591 = vld [vmem:[#allocation4 + $0x11c] sm:$0xf]
    %v2592 = vld [vmem:[#allocation4 + $0x128] sm:$0xf]
    %v2593 = vld [vmem:[#allocation4 + $0x134] sm:$0xf]
    %v2594 = vld [vmem:[#allocation4 + $0x140] sm:$0xf]
    %v2595 = vld [vmem:[#allocation4 + $0x14c] sm:$0xf]
    %v2596 = vld [vmem:[#allocation4 + $0x158] sm:$0xf]
    %v2597 = vld [vmem:[#allocation4 + $0x164] sm:$0xf]
    %v2598 = vld [vmem:[#allocation4 + $0x170] sm:$0xf]
    %v2599 = vld [vmem:[#allocation4 + $0x17c] sm:$0xf]
    %v2600 = vpack.c.bf16 %v2566, %v2566
    %v2601 = vpack.c.bf16 %v2567, %v2567
    %v2602 = vld [vmem:[#allocation6 + $0x18] sm:$0x1]
    %v2604 = vlaneseq
    %v2605 = vshrl.u32 %v2604, 7
    %v2606 = vsub.s32 0, %v2605
    %v2607 = vrot.slane %v2602, %v2606
    %v2641 = vunpack.c.l.b16 %v2568
    %v2642 = vunpack.c.l.b16 %v2569
    %v2643 = vunpack.c.l.b16 %v2570
    %v2644 = vunpack.c.l.b16 %v2571
    %v2645 = vunpack.c.l.b16 %v2572
    %v2646 = vunpack.c.l.b16 %v2573
    %v2647 = vunpack.c.l.b16 %v2574
    %v2648 = vunpack.c.l.b16 %v2575
    %v2649 = vunpack.c.l.b16 %v2576
    %v2650 = vunpack.c.l.b16 %v2577
    %v2651 = vunpack.c.l.b16 %v2578
    %v2652 = vunpack.c.l.b16 %v2579
    %v2653 = vunpack.c.l.b16 %v2580
    %v2654 = vunpack.c.l.b16 %v2581
    %v2655 = vunpack.c.l.b16 %v2582
    %v2656 = vunpack.c.l.b16 %v2583
    %v2657 = vunpack.c.l.b16 %v2584
    %v2658 = vunpack.c.l.b16 %v2585
    %v2659 = vunpack.c.l.b16 %v2586
    %v2660 = vunpack.c.l.b16 %v2587
    %v2661 = vunpack.c.l.b16 %v2588
    %v2662 = vunpack.c.l.b16 %v2589
    %v2663 = vunpack.c.l.b16 %v2590
    %v2664 = vunpack.c.l.b16 %v2591
    %v2665 = vunpack.c.l.b16 %v2592
    %v2666 = vunpack.c.l.b16 %v2593
    %v2667 = vunpack.c.l.b16 %v2594
    %v2668 = vunpack.c.l.b16 %v2595
    %v2669 = vunpack.c.l.b16 %v2596
    %v2670 = vunpack.c.l.b16 %v2597
    %v2671 = vunpack.c.l.b16 %v2598
    %v2672 = vunpack.c.l.b16 %v2599
    %v2673 = vpack.c.b16 %v2642, %v2641
    %v2674 = vpack.c.b16 %v2644, %v2643
    %v2675 = vpack.c.b16 %v2646, %v2645
    %v2676 = vpack.c.b16 %v2648, %v2647
    %v2677 = vpack.c.b16 %v2650, %v2649
    %v2678 = vpack.c.b16 %v2652, %v2651
    %v2679 = vpack.c.b16 %v2654, %v2653
    %v2680 = vpack.c.b16 %v2656, %v2655
    %v2681 = vpack.c.b16 %v2658, %v2657
    %v2682 = vpack.c.b16 %v2660, %v2659
    %v2683 = vpack.c.b16 %v2662, %v2661
    %v2684 = vpack.c.b16 %v2664, %v2663
    %v2685 = vpack.c.b16 %v2666, %v2665
    %v2686 = vpack.c.b16 %v2668, %v2667
    %v2687 = vpack.c.b16 %v2670, %v2669
    %v2688 = vpack.c.b16 %v2672, %v2671
    %2705 = vmatprep.subr.bf16.mxu0 0
    %2706 = vmatpush1.bf16.msra.mxu0 %v2680
    %2707 = vmatprep.subr.bf16.mxu0 0
    %2708 = vmatpush1.bf16.msra.mxu0 %v2679
    %2709 = vmatprep.subr.bf16.mxu0 0
    %2710 = vmatpush1.bf16.msra.mxu0 %v2678
    %2711 = vmatprep.subr.bf16.mxu0 0
    %2712 = vmatpush1.bf16.msra.mxu0 %v2677
    %2713 = vmatprep.subr.bf16.mxu0 0
    %2714 = vmatpush1.bf16.msra.mxu0 %v2676
    %2715 = vmatprep.subr.bf16.mxu0 0
    %2716 = vmatpush1.bf16.msra.mxu0 %v2675
    %2717 = vmatprep.subr.bf16.mxu0 0
    %2718 = vmatpush1.bf16.msra.mxu0 %v2674
    %2719 = vmatprep.subr.bf16.mxu0 0
    %2720 = vmatpush1.bf16.msra.mxu0 %v2673
    %2721 = vmatprep.subr.bf16.mxu0 0
    %2722 = vmatpush2.bf16.msra.mxu0 %v2688
    %2723 = vmatprep.subr.bf16.mxu0 0
    %2724 = vmatpush2.bf16.msra.mxu0 %v2687
    %2725 = vmatprep.subr.bf16.mxu0 0
    %2726 = vmatpush2.bf16.msra.mxu0 %v2686
    %2727 = vmatprep.subr.bf16.mxu0 0
    %2728 = vmatpush2.bf16.msra.mxu0 %v2685
    %2729 = vmatprep.subr.bf16.mxu0 0
    %2730 = vmatpush2.bf16.msra.mxu0 %v2684
    %2731 = vmatprep.subr.bf16.mxu0 0
    %2732 = vmatpush2.bf16.msra.mxu0 %v2683
    %2733 = vmatprep.subr.bf16.mxu0 0
    %2734 = vmatpush2.bf16.msra.mxu0 %v2682
    %2735 = vmatprep.subr.bf16.mxu0 0
    %2736 = vmatpush2.bf16.msra.mxu0 %v2681
    %2737 = vmatprep.mubr.bf16.mxu0 %v2601
    %2738 = vmatmul.mubr.bf16.gmra.mxu0 %v2600
    %v2739 = vpop.f32.mrf.mxu0
    %v2740 = vadd.f32 %v2607, %v2739
    %v2741 = vpop.f32.mrf.mxu0
    %v2742 = vpop.f32.mrf.mxu0
    %v2743 = vpop.f32.mrf.mxu0
    %2744 = vdwg.mxu0
    %v2745 = vtanh.pop %v2740
    %2746 = vst [vmem:[%s8] sm:$0xff] %v2745
    // Predicated region
    $region42: #{diffusion_attention_forward.1} parent=1 // pred_check
      _
    $region43: #{diffusion_attention_forward.1} parent=1 // pred_check_branch
      %2748 = sbr.rel (0) target = $region45
    $region44: #{diffusion_attention_forward.1} parent=1 // pred_region
      _
    $region45: #{diffusion_attention_forward.1} parent=1 // pred_fallthru
      _
    // Predicated region
    $region46: #{diffusion_attention_forward.1} parent=1 // pred_check
      _
    $region47: #{diffusion_attention_forward.1} parent=1 // pred_check_branch
      %2750 = sbr.rel (0) target = $region49
    $region48: #{diffusion_attention_forward.1} parent=1 // pred_region
      _
    $region49: #{diffusion_attention_forward.1} parent=1 // pred_fallthru
      _
    %2751 = vsyncpa [#allocation7], 1
    %2752 = vsyncpa [#allocation9], 1
  %2753 = vsyncmov [#allocation5]
  %s2754 = vpop.sfrf %2753
  %p2755 = scmp.eq.s32.totalorder %s2754, 0
  %p2756 = pneg %p2755
  %2758 = shalt.err (%p2756)
  %s2759 = scalar_lea.sflag [#allocation5], 1
  %2760 = vsyncmov %s2759
  %s2761 = vpop.sfrf %2760
  %p2762 = scmp.eq.s32.totalorder %s2761, 0
  %p2763 = pneg %p2762
  %2765 = shalt.err (%p2763)
  %s2766 = scalar_lea.sflag [#allocation5], 2
  %2767 = vsyncmov %s2766
  %s2768 = vpop.sfrf %2767
  %p2769 = scmp.eq.s32.totalorder %s2768, 0
  %p2770 = pneg %p2769
  %2772 = shalt.err (%p2770)

</llo_original>
